<compile_context>
chip_gen: v5e
topology: v5e:2x2
jax: 0.10.0
libtpu: 0.0.40
codegen_flags: <defaults>
</compile_context>

<pallas_src>
import math
from functools import partial

import jax
import jax.numpy as jnp
from jax.experimental import pallas as pl
from jax.experimental.pallas import tpu as pltpu

MODEL_DIM = 32
NUM_HEADS = 4
FF_DIM = 64
NUM_LAYERS = 2
BN_EPS = 1e-5  # PyTorch BatchNorm1d default eps


def _gelu(x):
    # TODO(synk): nn.GELU() is the exact erf-GELU; tanh approximation used for robust TPU lowering.
    return jax.nn.gelu(x, approximate=True)


def tst_encoder_kernel(num_layers, num_heads,
                       x_ref, wqkv_ref, wo_ref, w1_ref, w2_ref, vec_ref,
                       out_ref):
    B, L, D = x_ref.shape
    F = w1_ref.shape[-1]
    hd = D // num_heads
    scale = 1.0 / math.sqrt(hd)
    n_inv = 1.0 / (B * L)

    # Activation stays in vregs/VMEM across all layers.
    x2 = x_ref[...].astype(jnp.float32).reshape(B * L, D)     # [B*L, D]

    for l in range(num_layers):                               # static unroll over layers
        wqkv = wqkv_ref[l]                                    # [D, 3D]
        wo = wo_ref[l]                                        # [D, D]
        w1 = w1_ref[l]                                        # [D, F]
        w2 = w2_ref[l]                                        # [F, D]
        vec = vec_ref[l]                                      # [8, 3D] packed small params
        bqkv = vec[0:1, :]                                    # [1, 3D]
        bo = vec[1:2, :D]
        b1 = vec[2:3, :F]
        b2 = vec[3:4, :D]
        g1 = vec[4:5, :D]
        be1 = vec[5:6, :D]
        g2 = vec[6:7, :D]
        be2 = vec[7:8, :D]

        # ---- fused QKV projection (one MXU matmul) ----
        qkv = jnp.dot(x2, wqkv, preferred_element_type=jnp.float32) + bqkv   # [B*L, 3D]
        q = qkv[:, 0:D].reshape(B, L, D)
        k = qkv[:, D:2 * D].reshape(B, L, D)
        v = qkv[:, 2 * D:3 * D].reshape(B, L, D)

        # ---- scaled dot-product attention (heads unrolled statically; hd=8 slices) ----
        head_outs = []
        for h in range(num_heads):
            qh = q[:, :, h * hd:(h + 1) * hd]                 # [B, L, hd]
            kh = k[:, :, h * hd:(h + 1) * hd]
            vh = v[:, :, h * hd:(h + 1) * hd]
            s = jnp.einsum('bqe,bke->bqk', qh, kh,
                           preferred_element_type=jnp.float32) * scale       # [B, L, L]
            s = s - jnp.max(s, axis=-1, keepdims=True)
            p = jnp.exp(s)
            p = p * pl.reciprocal(jnp.sum(p, axis=-1, keepdims=True), approx=True)
            head_outs.append(jnp.einsum('bqk,bke->bqe', p, vh,
                                        preferred_element_type=jnp.float32))
        attn = jnp.concatenate(head_outs, axis=-1).reshape(B * L, D)

        # ---- output projection + residual ----
        attn = jnp.dot(attn, wo, preferred_element_type=jnp.float32) + bo
        y = x2 + attn                                         # [B*L, D]

        # ---- BatchNorm1d over model_dim (batch stats), single reduction pass ----
        mean1 = jnp.sum(y, axis=0, keepdims=True) * n_inv
        var1 = jnp.sum(y * y, axis=0, keepdims=True) * n_inv - mean1 * mean1
        y = (y - mean1) * (jax.lax.rsqrt(var1 + BN_EPS) * g1) + be1

        # ---- position-wise feed-forward + residual ----
        h1 = _gelu(jnp.dot(y, w1, preferred_element_type=jnp.float32) + b1)
        ff = jnp.dot(h1, w2, preferred_element_type=jnp.float32) + b2
        z = y + ff

        # ---- second BatchNorm ----
        mean2 = jnp.sum(z, axis=0, keepdims=True) * n_inv
        var2 = jnp.sum(z * z, axis=0, keepdims=True) * n_inv - mean2 * mean2
        z = (z - mean2) * (jax.lax.rsqrt(var2 + BN_EPS) * g2) + be2

        x2 = z                                                # carry to next layer

    out_ref[...] = x2.reshape(B, L, D).astype(out_ref.dtype)


@jax.jit
def tst_encoder(x, packed):
    args = (x, packed['wqkv'], packed['wo'], packed['w1'], packed['w2'], packed['vec'])
    return pl.pallas_call(
        partial(tst_encoder_kernel, NUM_LAYERS, NUM_HEADS),
        out_shape=jax.ShapeDtypeStruct(x.shape, x.dtype),
        in_specs=[pl.BlockSpec(memory_space=pltpu.MemorySpace.VMEM)] * len(args),
        out_specs=pl.BlockSpec(memory_space=pltpu.MemorySpace.VMEM),
    )(*args)


# ---------------- parameter construction / packing ----------------
def make_layer_params(key, d, f):
    ks = jax.random.split(key, 12)
    init = lambda k, shape: jax.random.normal(k, shape, jnp.float32) * 0.1
    return dict(
        wq=init(ks[0], (d, d)), bq=init(ks[1], (1, d)),
        wk=init(ks[2], (d, d)), bk=init(ks[3], (1, d)),
        wv=init(ks[4], (d, d)), bv=init(ks[5], (1, d)),
        wo=init(ks[6], (d, d)), bo=init(ks[7], (1, d)),
        g1=jnp.ones((1, d), jnp.float32), be1=jnp.zeros((1, d), jnp.float32),
        w1=init(ks[8], (d, f)), b1=init(ks[9], (1, f)),
        w2=init(ks[10], (f, d)), b2=init(ks[11], (1, d)),
        g2=jnp.ones((1, d), jnp.float32), be2=jnp.zeros((1, d), jnp.float32),
    )


def pack_params(layer_params, d):
    """Stack per-layer params along a leading layer axis; fuse QKV; pack small vectors."""
    c = 3 * d
    pad = lambda vrow: jnp.pad(vrow, ((0, 0), (0, c - vrow.shape[1])))
    wqkv = jnp.stack([jnp.concatenate([p['wq'], p['wk'], p['wv']], axis=1)
                      for p in layer_params])                                  # [NL, D, 3D]
    wo = jnp.stack([p['wo'] for p in layer_params])                            # [NL, D, D]
    w1 = jnp.stack([p['w1'] for p in layer_params])                            # [NL, D, F]
    w2 = jnp.stack([p['w2'] for p in layer_params])                            # [NL, F, D]
    vec = jnp.stack([
        jnp.concatenate([
            jnp.concatenate([p['bq'], p['bk'], p['bv']], axis=1),              # row 0: bqkv
            pad(p['bo']), pad(p['b1']), pad(p['b2']),                          # rows 1-3
            pad(p['g1']), pad(p['be1']), pad(p['g2']), pad(p['be2']),          # rows 4-7
        ], axis=0)
        for p in layer_params])                                                # [NL, 8, 3D]
    return dict(wqkv=wqkv, wo=wo, w1=w1, w2=w2, vec=vec)


# ---------------- pure-JAX reference (same math) for a correctness check ----------------
def _ref_layer(x, p):
    B, L, D = x.shape
    hd = D // NUM_HEADS
    scale = 1.0 / math.sqrt(hd)
    x2 = x.reshape(B * L, D)
    q = (x2 @ p['wq'] + p['bq']).reshape(B, L, D)
    k = (x2 @ p['wk'] + p['bk']).reshape(B, L, D)
    v = (x2 @ p['wv'] + p['bv']).reshape(B, L, D)
    outs = []
    for h in range(NUM_HEADS):
        qh, kh, vh = (t[:, :, h * hd:(h + 1) * hd] for t in (q, k, v))
        s = jnp.einsum('bqe,bke->bqk', qh, kh) * scale
        p_att = jax.nn.softmax(s, axis=-1)
        outs.append(jnp.einsum('bqk,bke->bqe', p_att, vh))
    attn = jnp.concatenate(outs, axis=-1).reshape(B * L, D) @ p['wo'] + p['bo']
    y = x2 + attn
    m1 = y.mean(0, keepdims=True)
    v1 = ((y - m1) ** 2).mean(0, keepdims=True)
    y = (y - m1) / jnp.sqrt(v1 + BN_EPS) * p['g1'] + p['be1']
    h1 = _gelu(y @ p['w1'] + p['b1'])
    z = y + (h1 @ p['w2'] + p['b2'])
    m2 = z.mean(0, keepdims=True)
    v2 = ((z - m2) ** 2).mean(0, keepdims=True)
    z = (z - m2) / jnp.sqrt(v2 + BN_EPS) * p['g2'] + p['be2']
    return z.reshape(B, L, D)


def _ref_encoder(x, layer_params):
    out = x
    for p in layer_params:  # residual_attention=False -> no score carried between layers
        out = _ref_layer(out, p)
    return out


if __name__ == "__main__":
    key = jax.random.PRNGKey(0)
    kx, kp = jax.random.split(key)
    B, L = 2, 8
    x = jax.random.normal(kx, (B, L, MODEL_DIM), jnp.float32)
    layer_keys = jax.random.split(kp, NUM_LAYERS)
    raw_params = [make_layer_params(k, MODEL_DIM, FF_DIM) for k in layer_keys]
    packed = pack_params(raw_params, MODEL_DIM)

    out = jax.block_until_ready(tst_encoder(x, packed))

    ref = _ref_encoder(x, raw_params)
    assert out.shape == (B, L, MODEL_DIM)
    max_err = float(jnp.max(jnp.abs(out - ref)))
    # Tolerance widened slightly (2e-3) to accommodate the approx-reciprocal softmax.
    assert jnp.allclose(out, ref, atol=2e-3, rtol=2e-3), f"max abs err {max_err}"
    print("KERNEL_OK")
</pallas_src>

<mosaic_0001>
module attributes {stable_mosaic.version = 11 : i64} {
  func.func @tst_encoder_kernel(%arg0: memref<2x8x32xf32, #tpu.memory_space<vmem>>, %arg1: memref<2x32x96xf32, #tpu.memory_space<vmem>>, %arg2: memref<2x32x32xf32, #tpu.memory_space<vmem>>, %arg3: memref<2x32x64xf32, #tpu.memory_space<vmem>>, %arg4: memref<2x64x32xf32, #tpu.memory_space<vmem>>, %arg5: memref<2x8x96xf32, #tpu.memory_space<vmem>>, %arg6: memref<2x8x32xf32, #tpu.memory_space<vmem>>) attributes {dimension_semantics = [], scalar_prefetch = 0 : i64, scratch_operands = 0 : i64, tpu.core_type = #tpu.core_type<tc>} {
    %c0 = arith.constant 0 : index
    %c0_0 = arith.constant 0 : index
    %c0_1 = arith.constant 0 : index
    %0 = vector.load %arg0[%c0, %c0_0, %c0_1] : memref<2x8x32xf32, #tpu.memory_space<vmem>>, vector<2x8x32xf32>
    %1 = vector.shape_cast %0 : vector<2x8x32xf32> to vector<16x32xf32>
    %c0_2 = arith.constant 0 : index
    %c0_3 = arith.constant 0 : index
    %c0_4 = arith.constant 0 : index
    %2 = vector.load %arg1[%c0_2, %c0_3, %c0_4] : memref<2x32x96xf32, #tpu.memory_space<vmem>>, vector<1x32x96xf32>
    %3 = vector.shape_cast %2 : vector<1x32x96xf32> to vector<32x96xf32>
    %c0_5 = arith.constant 0 : index
    %c0_6 = arith.constant 0 : index
    %c0_7 = arith.constant 0 : index
    %4 = vector.load %arg2[%c0_5, %c0_6, %c0_7] : memref<2x32x32xf32, #tpu.memory_space<vmem>>, vector<1x32x32xf32>
    %5 = vector.shape_cast %4 : vector<1x32x32xf32> to vector<32x32xf32>
    %c0_8 = arith.constant 0 : index
    %c0_9 = arith.constant 0 : index
    %c0_10 = arith.constant 0 : index
    %6 = vector.load %arg3[%c0_8, %c0_9, %c0_10] : memref<2x32x64xf32, #tpu.memory_space<vmem>>, vector<1x32x64xf32>
    %7 = vector.shape_cast %6 : vector<1x32x64xf32> to vector<32x64xf32>
    %c0_11 = arith.constant 0 : index
    %c0_12 = arith.constant 0 : index
    %c0_13 = arith.constant 0 : index
    %8 = vector.load %arg4[%c0_11, %c0_12, %c0_13] : memref<2x64x32xf32, #tpu.memory_space<vmem>>, vector<1x64x32xf32>
    %9 = vector.shape_cast %8 : vector<1x64x32xf32> to vector<64x32xf32>
    %c0_14 = arith.constant 0 : index
    %c0_15 = arith.constant 0 : index
    %c0_16 = arith.constant 0 : index
    %10 = vector.load %arg5[%c0_14, %c0_15, %c0_16] : memref<2x8x96xf32, #tpu.memory_space<vmem>>, vector<1x8x96xf32>
    %11 = vector.shape_cast %10 : vector<1x8x96xf32> to vector<8x96xf32>
    %12 = vector.extract_strided_slice %11 {offsets = [0, 0], sizes = [1, 96], strides = [1, 1]} : vector<8x96xf32> to vector<1x96xf32>
    %13 = vector.extract_strided_slice %11 {offsets = [1, 0], sizes = [1, 32], strides = [1, 1]} : vector<8x96xf32> to vector<1x32xf32>
    %14 = vector.extract_strided_slice %11 {offsets = [2, 0], sizes = [1, 64], strides = [1, 1]} : vector<8x96xf32> to vector<1x64xf32>
    %15 = vector.extract_strided_slice %11 {offsets = [3, 0], sizes = [1, 32], strides = [1, 1]} : vector<8x96xf32> to vector<1x32xf32>
    %16 = vector.extract_strided_slice %11 {offsets = [4, 0], sizes = [1, 32], strides = [1, 1]} : vector<8x96xf32> to vector<1x32xf32>
    %17 = vector.extract_strided_slice %11 {offsets = [5, 0], sizes = [1, 32], strides = [1, 1]} : vector<8x96xf32> to vector<1x32xf32>
    %18 = vector.extract_strided_slice %11 {offsets = [6, 0], sizes = [1, 32], strides = [1, 1]} : vector<8x96xf32> to vector<1x32xf32>
    %19 = vector.extract_strided_slice %11 {offsets = [7, 0], sizes = [1, 32], strides = [1, 1]} : vector<8x96xf32> to vector<1x32xf32>
    %cst = arith.constant dense<0.000000e+00> : vector<16x96xf32>
    %20 = tpu.matmul %1, %3, %cst {dimension_numbers = #tpu.dot_dimension_numbers<[1], [0], [0], [1], [0, 0, 1, 1], [], []>} : vector<16x32xf32>, vector<32x96xf32>, vector<16x96xf32> -> vector<16x96xf32>
    %21 = vector.broadcast %12 : vector<1x96xf32> to vector<16x96xf32>
    %22 = arith.addf %20, %21 : vector<16x96xf32>
    %23 = vector.extract_strided_slice %22 {offsets = [0, 0], sizes = [16, 32], strides = [1, 1]} : vector<16x96xf32> to vector<16x32xf32>
    %24 = vector.shape_cast %23 : vector<16x32xf32> to vector<2x8x32xf32>
    %25 = vector.extract_strided_slice %22 {offsets = [0, 32], sizes = [16, 32], strides = [1, 1]} : vector<16x96xf32> to vector<16x32xf32>
    %26 = vector.shape_cast %25 : vector<16x32xf32> to vector<2x8x32xf32>
    %27 = vector.extract_strided_slice %22 {offsets = [0, 64], sizes = [16, 32], strides = [1, 1]} : vector<16x96xf32> to vector<16x32xf32>
    %28 = vector.shape_cast %27 : vector<16x32xf32> to vector<2x8x32xf32>
    %29 = vector.extract_strided_slice %24 {offsets = [0, 0, 0], sizes = [2, 8, 8], strides = [1, 1, 1]} : vector<2x8x32xf32> to vector<2x8x8xf32>
    %30 = vector.extract_strided_slice %26 {offsets = [0, 0, 0], sizes = [2, 8, 8], strides = [1, 1, 1]} : vector<2x8x32xf32> to vector<2x8x8xf32>
    %31 = vector.extract_strided_slice %28 {offsets = [0, 0, 0], sizes = [2, 8, 8], strides = [1, 1, 1]} : vector<2x8x32xf32> to vector<2x8x8xf32>
    "tpu.trace_start"() <{level = 10 : i32, message = "bqe,bke->bqk"}> : () -> ()
    %cst_17 = arith.constant dense<0.000000e+00> : vector<2x8x8xf32>
    %32 = tpu.matmul %29, %30, %cst_17 {dimension_numbers = #tpu.dot_dimension_numbers<[2], [2], [1], [1], [0, 0, 0, 1, 1, 1], [0], [0]>} : vector<2x8x8xf32>, vector<2x8x8xf32>, vector<2x8x8xf32> -> vector<2x8x8xf32>
    "tpu.trace_stop"() : () -> ()
    %cst_18 = arith.constant 0.353553385 : f32
    %33 = vector.broadcast %cst_18 : f32 to vector<2x8x8xf32>
    %34 = arith.mulf %32, %33 : vector<2x8x8xf32>
    %cst_19 = arith.constant dense<0xFF800000> : vector<2x8xf32>
    %35 = vector.multi_reduction <maximumf>, %34, %cst_19 [2] : vector<2x8x8xf32> to vector<2x8xf32>
    %36 = vector.shape_cast %35 : vector<2x8xf32> to vector<2x8x1xf32>
    %37 = vector.broadcast %36 : vector<2x8x1xf32> to vector<2x8x8xf32>
    %38 = arith.subf %34, %37 : vector<2x8x8xf32>
    %39 = math.exp %38 : vector<2x8x8xf32>
    %cst_20 = arith.constant dense<0.000000e+00> : vector<2x8xf32>
    %40 = vector.multi_reduction <add>, %39, %cst_20 [2] : vector<2x8x8xf32> to vector<2x8xf32>
    %41 = vector.shape_cast %40 : vector<2x8xf32> to vector<2x8x1xf32>
    %42 = tpu.reciprocal %41 {approx = true} : vector<2x8x1xf32> -> vector<2x8x1xf32>
    %43 = vector.broadcast %42 : vector<2x8x1xf32> to vector<2x8x8xf32>
    %44 = arith.mulf %39, %43 : vector<2x8x8xf32>
    "tpu.trace_start"() <{level = 10 : i32, message = "bqk,bke->bqe"}> : () -> ()
    %cst_21 = arith.constant dense<0.000000e+00> : vector<2x8x8xf32>
    %45 = tpu.matmul %44, %31, %cst_21 {dimension_numbers = #tpu.dot_dimension_numbers<[2], [1], [1], [2], [0, 0, 0, 1, 1, 2], [0], [0]>} : vector<2x8x8xf32>, vector<2x8x8xf32>, vector<2x8x8xf32> -> vector<2x8x8xf32>
    "tpu.trace_stop"() : () -> ()
    %46 = vector.extract_strided_slice %24 {offsets = [0, 0, 8], sizes = [2, 8, 8], strides = [1, 1, 1]} : vector<2x8x32xf32> to vector<2x8x8xf32>
    %47 = vector.extract_strided_slice %26 {offsets = [0, 0, 8], sizes = [2, 8, 8], strides = [1, 1, 1]} : vector<2x8x32xf32> to vector<2x8x8xf32>
    %48 = vector.extract_strided_slice %28 {offsets = [0, 0, 8], sizes = [2, 8, 8], strides = [1, 1, 1]} : vector<2x8x32xf32> to vector<2x8x8xf32>
    "tpu.trace_start"() <{level = 10 : i32, message = "bqe,bke->bqk"}> : () -> ()
    %cst_22 = arith.constant dense<0.000000e+00> : vector<2x8x8xf32>
    %49 = tpu.matmul %46, %47, %cst_22 {dimension_numbers = #tpu.dot_dimension_numbers<[2], [2], [1], [1], [0, 0, 0, 1, 1, 1], [0], [0]>} : vector<2x8x8xf32>, vector<2x8x8xf32>, vector<2x8x8xf32> -> vector<2x8x8xf32>
    "tpu.trace_stop"() : () -> ()
    %cst_23 = arith.constant 0.353553385 : f32
    %50 = vector.broadcast %cst_23 : f32 to vector<2x8x8xf32>
    %51 = arith.mulf %49, %50 : vector<2x8x8xf32>
    %cst_24 = arith.constant dense<0xFF800000> : vector<2x8xf32>
    %52 = vector.multi_reduction <maximumf>, %51, %cst_24 [2] : vector<2x8x8xf32> to vector<2x8xf32>
    %53 = vector.shape_cast %52 : vector<2x8xf32> to vector<2x8x1xf32>
    %54 = vector.broadcast %53 : vector<2x8x1xf32> to vector<2x8x8xf32>
    %55 = arith.subf %51, %54 : vector<2x8x8xf32>
    %56 = math.exp %55 : vector<2x8x8xf32>
    %cst_25 = arith.constant dense<0.000000e+00> : vector<2x8xf32>
    %57 = vector.multi_reduction <add>, %56, %cst_25 [2] : vector<2x8x8xf32> to vector<2x8xf32>
    %58 = vector.shape_cast %57 : vector<2x8xf32> to vector<2x8x1xf32>
    %59 = tpu.reciprocal %58 {approx = true} : vector<2x8x1xf32> -> vector<2x8x1xf32>
    %60 = vector.broadcast %59 : vector<2x8x1xf32> to vector<2x8x8xf32>
    %61 = arith.mulf %56, %60 : vector<2x8x8xf32>
    "tpu.trace_start"() <{level = 10 : i32, message = "bqk,bke->bqe"}> : () -> ()
    %cst_26 = arith.constant dense<0.000000e+00> : vector<2x8x8xf32>
    %62 = tpu.matmul %61, %48, %cst_26 {dimension_numbers = #tpu.dot_dimension_numbers<[2], [1], [1], [2], [0, 0, 0, 1, 1, 2], [0], [0]>} : vector<2x8x8xf32>, vector<2x8x8xf32>, vector<2x8x8xf32> -> vector<2x8x8xf32>
    "tpu.trace_stop"() : () -> ()
    %63 = vector.extract_strided_slice %24 {offsets = [0, 0, 16], sizes = [2, 8, 8], strides = [1, 1, 1]} : vector<2x8x32xf32> to vector<2x8x8xf32>
    %64 = vector.extract_strided_slice %26 {offsets = [0, 0, 16], sizes = [2, 8, 8], strides = [1, 1, 1]} : vector<2x8x32xf32> to vector<2x8x8xf32>
    %65 = vector.extract_strided_slice %28 {offsets = [0, 0, 16], sizes = [2, 8, 8], strides = [1, 1, 1]} : vector<2x8x32xf32> to vector<2x8x8xf32>
    "tpu.trace_start"() <{level = 10 : i32, message = "bqe,bke->bqk"}> : () -> ()
    %cst_27 = arith.constant dense<0.000000e+00> : vector<2x8x8xf32>
    %66 = tpu.matmul %63, %64, %cst_27 {dimension_numbers = #tpu.dot_dimension_numbers<[2], [2], [1], [1], [0, 0, 0, 1, 1, 1], [0], [0]>} : vector<2x8x8xf32>, vector<2x8x8xf32>, vector<2x8x8xf32> -> vector<2x8x8xf32>
    "tpu.trace_stop"() : () -> ()
    %cst_28 = arith.constant 0.353553385 : f32
    %67 = vector.broadcast %cst_28 : f32 to vector<2x8x8xf32>
    %68 = arith.mulf %66, %67 : vector<2x8x8xf32>
    %cst_29 = arith.constant dense<0xFF800000> : vector<2x8xf32>
    %69 = vector.multi_reduction <maximumf>, %68, %cst_29 [2] : vector<2x8x8xf32> to vector<2x8xf32>
    %70 = vector.shape_cast %69 : vector<2x8xf32> to vector<2x8x1xf32>
    %71 = vector.broadcast %70 : vector<2x8x1xf32> to vector<2x8x8xf32>
    %72 = arith.subf %68, %71 : vector<2x8x8xf32>
    %73 = math.exp %72 : vector<2x8x8xf32>
    %cst_30 = arith.constant dense<0.000000e+00> : vector<2x8xf32>
    %74 = vector.multi_reduction <add>, %73, %cst_30 [2] : vector<2x8x8xf32> to vector<2x8xf32>
    %75 = vector.shape_cast %74 : vector<2x8xf32> to vector<2x8x1xf32>
    %76 = tpu.reciprocal %75 {approx = true} : vector<2x8x1xf32> -> vector<2x8x1xf32>
    %77 = vector.broadcast %76 : vector<2x8x1xf32> to vector<2x8x8xf32>
    %78 = arith.mulf %73, %77 : vector<2x8x8xf32>
    "tpu.trace_start"() <{level = 10 : i32, message = "bqk,bke->bqe"}> : () -> ()
    %cst_31 = arith.constant dense<0.000000e+00> : vector<2x8x8xf32>
    %79 = tpu.matmul %78, %65, %cst_31 {dimension_numbers = #tpu.dot_dimension_numbers<[2], [1], [1], [2], [0, 0, 0, 1, 1, 2], [0], [0]>} : vector<2x8x8xf32>, vector<2x8x8xf32>, vector<2x8x8xf32> -> vector<2x8x8xf32>
    "tpu.trace_stop"() : () -> ()
    %80 = vector.extract_strided_slice %24 {offsets = [0, 0, 24], sizes = [2, 8, 8], strides = [1, 1, 1]} : vector<2x8x32xf32> to vector<2x8x8xf32>
    %81 = vector.extract_strided_slice %26 {offsets = [0, 0, 24], sizes = [2, 8, 8], strides = [1, 1, 1]} : vector<2x8x32xf32> to vector<2x8x8xf32>
    %82 = vector.extract_strided_slice %28 {offsets = [0, 0, 24], sizes = [2, 8, 8], strides = [1, 1, 1]} : vector<2x8x32xf32> to vector<2x8x8xf32>
    "tpu.trace_start"() <{level = 10 : i32, message = "bqe,bke->bqk"}> : () -> ()
    %cst_32 = arith.constant dense<0.000000e+00> : vector<2x8x8xf32>
    %83 = tpu.matmul %80, %81, %cst_32 {dimension_numbers = #tpu.dot_dimension_numbers<[2], [2], [1], [1], [0, 0, 0, 1, 1, 1], [0], [0]>} : vector<2x8x8xf32>, vector<2x8x8xf32>, vector<2x8x8xf32> -> vector<2x8x8xf32>
    "tpu.trace_stop"() : () -> ()
    %cst_33 = arith.constant 0.353553385 : f32
    %84 = vector.broadcast %cst_33 : f32 to vector<2x8x8xf32>
    %85 = arith.mulf %83, %84 : vector<2x8x8xf32>
    %cst_34 = arith.constant dense<0xFF800000> : vector<2x8xf32>
    %86 = vector.multi_reduction <maximumf>, %85, %cst_34 [2] : vector<2x8x8xf32> to vector<2x8xf32>
    %87 = vector.shape_cast %86 : vector<2x8xf32> to vector<2x8x1xf32>
    %88 = vector.broadcast %87 : vector<2x8x1xf32> to vector<2x8x8xf32>
    %89 = arith.subf %85, %88 : vector<2x8x8xf32>
    %90 = math.exp %89 : vector<2x8x8xf32>
    %cst_35 = arith.constant dense<0.000000e+00> : vector<2x8xf32>
    %91 = vector.multi_reduction <add>, %90, %cst_35 [2] : vector<2x8x8xf32> to vector<2x8xf32>
    %92 = vector.shape_cast %91 : vector<2x8xf32> to vector<2x8x1xf32>
    %93 = tpu.reciprocal %92 {approx = true} : vector<2x8x1xf32> -> vector<2x8x1xf32>
    %94 = vector.broadcast %93 : vector<2x8x1xf32> to vector<2x8x8xf32>
    %95 = arith.mulf %90, %94 : vector<2x8x8xf32>
    "tpu.trace_start"() <{level = 10 : i32, message = "bqk,bke->bqe"}> : () -> ()
    %cst_36 = arith.constant dense<0.000000e+00> : vector<2x8x8xf32>
    %96 = tpu.matmul %95, %82, %cst_36 {dimension_numbers = #tpu.dot_dimension_numbers<[2], [1], [1], [2], [0, 0, 0, 1, 1, 2], [0], [0]>} : vector<2x8x8xf32>, vector<2x8x8xf32>, vector<2x8x8xf32> -> vector<2x8x8xf32>
    "tpu.trace_stop"() : () -> ()
    %97 = tpu.concatenate %45, %62, %79, %96 in 2 : vector<2x8x8xf32>, vector<2x8x8xf32>, vector<2x8x8xf32>, vector<2x8x8xf32> -> vector<2x8x32xf32>
    %98 = vector.shape_cast %97 : vector<2x8x32xf32> to vector<16x32xf32>
    %cst_37 = arith.constant dense<0.000000e+00> : vector<16x32xf32>
    %99 = tpu.matmul %98, %5, %cst_37 {dimension_numbers = #tpu.dot_dimension_numbers<[1], [0], [0], [1], [0, 0, 1, 1], [], []>} : vector<16x32xf32>, vector<32x32xf32>, vector<16x32xf32> -> vector<16x32xf32>
    %100 = vector.broadcast %13 : vector<1x32xf32> to vector<16x32xf32>
    %101 = arith.addf %99, %100 : vector<16x32xf32>
    %102 = arith.addf %1, %101 : vector<16x32xf32>
    %cst_38 = arith.constant dense<0.000000e+00> : vector<32xf32>
    %103 = vector.multi_reduction <add>, %102, %cst_38 [0] : vector<16x32xf32> to vector<32xf32>
    %104 = vector.shape_cast %103 : vector<32xf32> to vector<1x32xf32>
    %cst_39 = arith.constant 6.250000e-02 : f32
    %105 = vector.broadcast %cst_39 : f32 to vector<1x32xf32>
    %106 = arith.mulf %104, %105 : vector<1x32xf32>
    %107 = arith.mulf %102, %102 : vector<16x32xf32>
    %cst_40 = arith.constant dense<0.000000e+00> : vector<32xf32>
    %108 = vector.multi_reduction <add>, %107, %cst_40 [0] : vector<16x32xf32> to vector<32xf32>
    %109 = vector.shape_cast %108 : vector<32xf32> to vector<1x32xf32>
    %cst_41 = arith.constant 6.250000e-02 : f32
    %110 = vector.broadcast %cst_41 : f32 to vector<1x32xf32>
    %111 = arith.mulf %109, %110 : vector<1x32xf32>
    %112 = arith.mulf %106, %106 : vector<1x32xf32>
    %113 = arith.subf %111, %112 : vector<1x32xf32>
    %114 = vector.broadcast %106 : vector<1x32xf32> to vector<16x32xf32>
    %115 = arith.subf %102, %114 : vector<16x32xf32>
    %cst_42 = arith.constant 9.99999974E-6 : f32
    %116 = vector.broadcast %cst_42 : f32 to vector<1x32xf32>
    %117 = arith.addf %113, %116 : vector<1x32xf32>
    %118 = math.rsqrt %117 : vector<1x32xf32>
    %119 = arith.mulf %118, %16 : vector<1x32xf32>
    %120 = vector.broadcast %119 : vector<1x32xf32> to vector<16x32xf32>
    %121 = arith.mulf %115, %120 : vector<16x32xf32>
    %122 = vector.broadcast %17 : vector<1x32xf32> to vector<16x32xf32>
    %123 = arith.addf %121, %122 : vector<16x32xf32>
    %cst_43 = arith.constant dense<0.000000e+00> : vector<16x64xf32>
    %124 = tpu.matmul %123, %7, %cst_43 {dimension_numbers = #tpu.dot_dimension_numbers<[1], [0], [0], [1], [0, 0, 1, 1], [], []>} : vector<16x32xf32>, vector<32x64xf32>, vector<16x64xf32> -> vector<16x64xf32>
    %125 = vector.broadcast %14 : vector<1x64xf32> to vector<16x64xf32>
    %126 = arith.addf %124, %125 : vector<16x64xf32>
    %127 = arith.mulf %126, %126 : vector<16x64xf32>
    %128 = arith.mulf %126, %127 : vector<16x64xf32>
    %cst_44 = arith.constant 4.471500e-02 : f32
    %129 = vector.broadcast %cst_44 : f32 to vector<16x64xf32>
    %130 = arith.mulf %129, %128 : vector<16x64xf32>
    %131 = arith.addf %126, %130 : vector<16x64xf32>
    %cst_45 = arith.constant 0.797884583 : f32
    %132 = vector.broadcast %cst_45 : f32 to vector<16x64xf32>
    %133 = arith.mulf %132, %131 : vector<16x64xf32>
    %134 = math.tanh %133 : vector<16x64xf32>
    %cst_46 = arith.constant 1.000000e+00 : f32
    %135 = vector.broadcast %cst_46 : f32 to vector<16x64xf32>
    %136 = arith.addf %135, %134 : vector<16x64xf32>
    %cst_47 = arith.constant 5.000000e-01 : f32
    %137 = vector.broadcast %cst_47 : f32 to vector<16x64xf32>
    %138 = arith.mulf %137, %136 : vector<16x64xf32>
    %139 = arith.mulf %126, %138 : vector<16x64xf32>
    %cst_48 = arith.constant dense<0.000000e+00> : vector<16x32xf32>
    %140 = tpu.matmul %139, %9, %cst_48 {dimension_numbers = #tpu.dot_dimension_numbers<[1], [0], [0], [1], [0, 0, 1, 1], [], []>} : vector<16x64xf32>, vector<64x32xf32>, vector<16x32xf32> -> vector<16x32xf32>
    %141 = vector.broadcast %15 : vector<1x32xf32> to vector<16x32xf32>
    %142 = arith.addf %140, %141 : vector<16x32xf32>
    %143 = arith.addf %123, %142 : vector<16x32xf32>
    %cst_49 = arith.constant dense<0.000000e+00> : vector<32xf32>
    %144 = vector.multi_reduction <add>, %143, %cst_49 [0] : vector<16x32xf32> to vector<32xf32>
    %145 = vector.shape_cast %144 : vector<32xf32> to vector<1x32xf32>
    %cst_50 = arith.constant 6.250000e-02 : f32
    %146 = vector.broadcast %cst_50 : f32 to vector<1x32xf32>
    %147 = arith.mulf %145, %146 : vector<1x32xf32>
    %148 = arith.mulf %143, %143 : vector<16x32xf32>
    %cst_51 = arith.constant dense<0.000000e+00> : vector<32xf32>
    %149 = vector.multi_reduction <add>, %148, %cst_51 [0] : vector<16x32xf32> to vector<32xf32>
    %150 = vector.shape_cast %149 : vector<32xf32> to vector<1x32xf32>
    %cst_52 = arith.constant 6.250000e-02 : f32
    %151 = vector.broadcast %cst_52 : f32 to vector<1x32xf32>
    %152 = arith.mulf %150, %151 : vector<1x32xf32>
    %153 = arith.mulf %147, %147 : vector<1x32xf32>
    %154 = arith.subf %152, %153 : vector<1x32xf32>
    %155 = vector.broadcast %147 : vector<1x32xf32> to vector<16x32xf32>
    %156 = arith.subf %143, %155 : vector<16x32xf32>
    %cst_53 = arith.constant 9.99999974E-6 : f32
    %157 = vector.broadcast %cst_53 : f32 to vector<1x32xf32>
    %158 = arith.addf %154, %157 : vector<1x32xf32>
    %159 = math.rsqrt %158 : vector<1x32xf32>
    %160 = arith.mulf %159, %18 : vector<1x32xf32>
    %161 = vector.broadcast %160 : vector<1x32xf32> to vector<16x32xf32>
    %162 = arith.mulf %156, %161 : vector<16x32xf32>
    %163 = vector.broadcast %19 : vector<1x32xf32> to vector<16x32xf32>
    %164 = arith.addf %162, %163 : vector<16x32xf32>
    %c1 = arith.constant 1 : index
    %c0_54 = arith.constant 0 : index
    %c0_55 = arith.constant 0 : index
    %165 = vector.load %arg1[%c1, %c0_54, %c0_55] : memref<2x32x96xf32, #tpu.memory_space<vmem>>, vector<1x32x96xf32>
    %166 = vector.shape_cast %165 : vector<1x32x96xf32> to vector<32x96xf32>
    %c1_56 = arith.constant 1 : index
    %c0_57 = arith.constant 0 : index
    %c0_58 = arith.constant 0 : index
    %167 = vector.load %arg2[%c1_56, %c0_57, %c0_58] : memref<2x32x32xf32, #tpu.memory_space<vmem>>, vector<1x32x32xf32>
    %168 = vector.shape_cast %167 : vector<1x32x32xf32> to vector<32x32xf32>
    %c1_59 = arith.constant 1 : index
    %c0_60 = arith.constant 0 : index
    %c0_61 = arith.constant 0 : index
    %169 = vector.load %arg3[%c1_59, %c0_60, %c0_61] : memref<2x32x64xf32, #tpu.memory_space<vmem>>, vector<1x32x64xf32>
    %170 = vector.shape_cast %169 : vector<1x32x64xf32> to vector<32x64xf32>
    %c1_62 = arith.constant 1 : index
    %c0_63 = arith.constant 0 : index
    %c0_64 = arith.constant 0 : index
    %171 = vector.load %arg4[%c1_62, %c0_63, %c0_64] : memref<2x64x32xf32, #tpu.memory_space<vmem>>, vector<1x64x32xf32>
    %172 = vector.shape_cast %171 : vector<1x64x32xf32> to vector<64x32xf32>
    %c1_65 = arith.constant 1 : index
    %c0_66 = arith.constant 0 : index
    %c0_67 = arith.constant 0 : index
    %173 = vector.load %arg5[%c1_65, %c0_66, %c0_67] : memref<2x8x96xf32, #tpu.memory_space<vmem>>, vector<1x8x96xf32>
    %174 = vector.shape_cast %173 : vector<1x8x96xf32> to vector<8x96xf32>
    %175 = vector.extract_strided_slice %174 {offsets = [0, 0], sizes = [1, 96], strides = [1, 1]} : vector<8x96xf32> to vector<1x96xf32>
    %176 = vector.extract_strided_slice %174 {offsets = [1, 0], sizes = [1, 32], strides = [1, 1]} : vector<8x96xf32> to vector<1x32xf32>
    %177 = vector.extract_strided_slice %174 {offsets = [2, 0], sizes = [1, 64], strides = [1, 1]} : vector<8x96xf32> to vector<1x64xf32>
    %178 = vector.extract_strided_slice %174 {offsets = [3, 0], sizes = [1, 32], strides = [1, 1]} : vector<8x96xf32> to vector<1x32xf32>
    %179 = vector.extract_strided_slice %174 {offsets = [4, 0], sizes = [1, 32], strides = [1, 1]} : vector<8x96xf32> to vector<1x32xf32>
    %180 = vector.extract_strided_slice %174 {offsets = [5, 0], sizes = [1, 32], strides = [1, 1]} : vector<8x96xf32> to vector<1x32xf32>
    %181 = vector.extract_strided_slice %174 {offsets = [6, 0], sizes = [1, 32], strides = [1, 1]} : vector<8x96xf32> to vector<1x32xf32>
    %182 = vector.extract_strided_slice %174 {offsets = [7, 0], sizes = [1, 32], strides = [1, 1]} : vector<8x96xf32> to vector<1x32xf32>
    %cst_68 = arith.constant dense<0.000000e+00> : vector<16x96xf32>
    %183 = tpu.matmul %164, %166, %cst_68 {dimension_numbers = #tpu.dot_dimension_numbers<[1], [0], [0], [1], [0, 0, 1, 1], [], []>} : vector<16x32xf32>, vector<32x96xf32>, vector<16x96xf32> -> vector<16x96xf32>
    %184 = vector.broadcast %175 : vector<1x96xf32> to vector<16x96xf32>
    %185 = arith.addf %183, %184 : vector<16x96xf32>
    %186 = vector.extract_strided_slice %185 {offsets = [0, 0], sizes = [16, 32], strides = [1, 1]} : vector<16x96xf32> to vector<16x32xf32>
    %187 = vector.shape_cast %186 : vector<16x32xf32> to vector<2x8x32xf32>
    %188 = vector.extract_strided_slice %185 {offsets = [0, 32], sizes = [16, 32], strides = [1, 1]} : vector<16x96xf32> to vector<16x32xf32>
    %189 = vector.shape_cast %188 : vector<16x32xf32> to vector<2x8x32xf32>
    %190 = vector.extract_strided_slice %185 {offsets = [0, 64], sizes = [16, 32], strides = [1, 1]} : vector<16x96xf32> to vector<16x32xf32>
    %191 = vector.shape_cast %190 : vector<16x32xf32> to vector<2x8x32xf32>
    %192 = vector.extract_strided_slice %187 {offsets = [0, 0, 0], sizes = [2, 8, 8], strides = [1, 1, 1]} : vector<2x8x32xf32> to vector<2x8x8xf32>
    %193 = vector.extract_strided_slice %189 {offsets = [0, 0, 0], sizes = [2, 8, 8], strides = [1, 1, 1]} : vector<2x8x32xf32> to vector<2x8x8xf32>
    %194 = vector.extract_strided_slice %191 {offsets = [0, 0, 0], sizes = [2, 8, 8], strides = [1, 1, 1]} : vector<2x8x32xf32> to vector<2x8x8xf32>
    "tpu.trace_start"() <{level = 10 : i32, message = "bqe,bke->bqk"}> : () -> ()
    %cst_69 = arith.constant dense<0.000000e+00> : vector<2x8x8xf32>
    %195 = tpu.matmul %192, %193, %cst_69 {dimension_numbers = #tpu.dot_dimension_numbers<[2], [2], [1], [1], [0, 0, 0, 1, 1, 1], [0], [0]>} : vector<2x8x8xf32>, vector<2x8x8xf32>, vector<2x8x8xf32> -> vector<2x8x8xf32>
    "tpu.trace_stop"() : () -> ()
    %cst_70 = arith.constant 0.353553385 : f32
    %196 = vector.broadcast %cst_70 : f32 to vector<2x8x8xf32>
    %197 = arith.mulf %195, %196 : vector<2x8x8xf32>
    %cst_71 = arith.constant dense<0xFF800000> : vector<2x8xf32>
    %198 = vector.multi_reduction <maximumf>, %197, %cst_71 [2] : vector<2x8x8xf32> to vector<2x8xf32>
    %199 = vector.shape_cast %198 : vector<2x8xf32> to vector<2x8x1xf32>
    %200 = vector.broadcast %199 : vector<2x8x1xf32> to vector<2x8x8xf32>
    %201 = arith.subf %197, %200 : vector<2x8x8xf32>
    %202 = math.exp %201 : vector<2x8x8xf32>
    %cst_72 = arith.constant dense<0.000000e+00> : vector<2x8xf32>
    %203 = vector.multi_reduction <add>, %202, %cst_72 [2] : vector<2x8x8xf32> to vector<2x8xf32>
    %204 = vector.shape_cast %203 : vector<2x8xf32> to vector<2x8x1xf32>
    %205 = tpu.reciprocal %204 {approx = true} : vector<2x8x1xf32> -> vector<2x8x1xf32>
    %206 = vector.broadcast %205 : vector<2x8x1xf32> to vector<2x8x8xf32>
    %207 = arith.mulf %202, %206 : vector<2x8x8xf32>
    "tpu.trace_start"() <{level = 10 : i32, message = "bqk,bke->bqe"}> : () -> ()
    %cst_73 = arith.constant dense<0.000000e+00> : vector<2x8x8xf32>
    %208 = tpu.matmul %207, %194, %cst_73 {dimension_numbers = #tpu.dot_dimension_numbers<[2], [1], [1], [2], [0, 0, 0, 1, 1, 2], [0], [0]>} : vector<2x8x8xf32>, vector<2x8x8xf32>, vector<2x8x8xf32> -> vector<2x8x8xf32>
    "tpu.trace_stop"() : () -> ()
    %209 = vector.extract_strided_slice %187 {offsets = [0, 0, 8], sizes = [2, 8, 8], strides = [1, 1, 1]} : vector<2x8x32xf32> to vector<2x8x8xf32>
    %210 = vector.extract_strided_slice %189 {offsets = [0, 0, 8], sizes = [2, 8, 8], strides = [1, 1, 1]} : vector<2x8x32xf32> to vector<2x8x8xf32>
    %211 = vector.extract_strided_slice %191 {offsets = [0, 0, 8], sizes = [2, 8, 8], strides = [1, 1, 1]} : vector<2x8x32xf32> to vector<2x8x8xf32>
    "tpu.trace_start"() <{level = 10 : i32, message = "bqe,bke->bqk"}> : () -> ()
    %cst_74 = arith.constant dense<0.000000e+00> : vector<2x8x8xf32>
    %212 = tpu.matmul %209, %210, %cst_74 {dimension_numbers = #tpu.dot_dimension_numbers<[2], [2], [1], [1], [0, 0, 0, 1, 1, 1], [0], [0]>} : vector<2x8x8xf32>, vector<2x8x8xf32>, vector<2x8x8xf32> -> vector<2x8x8xf32>
    "tpu.trace_stop"() : () -> ()
    %cst_75 = arith.constant 0.353553385 : f32
    %213 = vector.broadcast %cst_75 : f32 to vector<2x8x8xf32>
    %214 = arith.mulf %212, %213 : vector<2x8x8xf32>
    %cst_76 = arith.constant dense<0xFF800000> : vector<2x8xf32>
    %215 = vector.multi_reduction <maximumf>, %214, %cst_76 [2] : vector<2x8x8xf32> to vector<2x8xf32>
    %216 = vector.shape_cast %215 : vector<2x8xf32> to vector<2x8x1xf32>
    %217 = vector.broadcast %216 : vector<2x8x1xf32> to vector<2x8x8xf32>
    %218 = arith.subf %214, %217 : vector<2x8x8xf32>
    %219 = math.exp %218 : vector<2x8x8xf32>
    %cst_77 = arith.constant dense<0.000000e+00> : vector<2x8xf32>
    %220 = vector.multi_reduction <add>, %219, %cst_77 [2] : vector<2x8x8xf32> to vector<2x8xf32>
    %221 = vector.shape_cast %220 : vector<2x8xf32> to vector<2x8x1xf32>
    %222 = tpu.reciprocal %221 {approx = true} : vector<2x8x1xf32> -> vector<2x8x1xf32>
    %223 = vector.broadcast %222 : vector<2x8x1xf32> to vector<2x8x8xf32>
    %224 = arith.mulf %219, %223 : vector<2x8x8xf32>
    "tpu.trace_start"() <{level = 10 : i32, message = "bqk,bke->bqe"}> : () -> ()
    %cst_78 = arith.constant dense<0.000000e+00> : vector<2x8x8xf32>
    %225 = tpu.matmul %224, %211, %cst_78 {dimension_numbers = #tpu.dot_dimension_numbers<[2], [1], [1], [2], [0, 0, 0, 1, 1, 2], [0], [0]>} : vector<2x8x8xf32>, vector<2x8x8xf32>, vector<2x8x8xf32> -> vector<2x8x8xf32>
    "tpu.trace_stop"() : () -> ()
    %226 = vector.extract_strided_slice %187 {offsets = [0, 0, 16], sizes = [2, 8, 8], strides = [1, 1, 1]} : vector<2x8x32xf32> to vector<2x8x8xf32>
    %227 = vector.extract_strided_slice %189 {offsets = [0, 0, 16], sizes = [2, 8, 8], strides = [1, 1, 1]} : vector<2x8x32xf32> to vector<2x8x8xf32>
    %228 = vector.extract_strided_slice %191 {offsets = [0, 0, 16], sizes = [2, 8, 8], strides = [1, 1, 1]} : vector<2x8x32xf32> to vector<2x8x8xf32>
    "tpu.trace_start"() <{level = 10 : i32, message = "bqe,bke->bqk"}> : () -> ()
    %cst_79 = arith.constant dense<0.000000e+00> : vector<2x8x8xf32>
    %229 = tpu.matmul %226, %227, %cst_79 {dimension_numbers = #tpu.dot_dimension_numbers<[2], [2], [1], [1], [0, 0, 0, 1, 1, 1], [0], [0]>} : vector<2x8x8xf32>, vector<2x8x8xf32>, vector<2x8x8xf32> -> vector<2x8x8xf32>
    "tpu.trace_stop"() : () -> ()
    %cst_80 = arith.constant 0.353553385 : f32
    %230 = vector.broadcast %cst_80 : f32 to vector<2x8x8xf32>
    %231 = arith.mulf %229, %230 : vector<2x8x8xf32>
    %cst_81 = arith.constant dense<0xFF800000> : vector<2x8xf32>
    %232 = vector.multi_reduction <maximumf>, %231, %cst_81 [2] : vector<2x8x8xf32> to vector<2x8xf32>
    %233 = vector.shape_cast %232 : vector<2x8xf32> to vector<2x8x1xf32>
    %234 = vector.broadcast %233 : vector<2x8x1xf32> to vector<2x8x8xf32>
    %235 = arith.subf %231, %234 : vector<2x8x8xf32>
    %236 = math.exp %235 : vector<2x8x8xf32>
    %cst_82 = arith.constant dense<0.000000e+00> : vector<2x8xf32>
    %237 = vector.multi_reduction <add>, %236, %cst_82 [2] : vector<2x8x8xf32> to vector<2x8xf32>
    %238 = vector.shape_cast %237 : vector<2x8xf32> to vector<2x8x1xf32>
    %239 = tpu.reciprocal %238 {approx = true} : vector<2x8x1xf32> -> vector<2x8x1xf32>
    %240 = vector.broadcast %239 : vector<2x8x1xf32> to vector<2x8x8xf32>
    %241 = arith.mulf %236, %240 : vector<2x8x8xf32>
    "tpu.trace_start"() <{level = 10 : i32, message = "bqk,bke->bqe"}> : () -> ()
    %cst_83 = arith.constant dense<0.000000e+00> : vector<2x8x8xf32>
    %242 = tpu.matmul %241, %228, %cst_83 {dimension_numbers = #tpu.dot_dimension_numbers<[2], [1], [1], [2], [0, 0, 0, 1, 1, 2], [0], [0]>} : vector<2x8x8xf32>, vector<2x8x8xf32>, vector<2x8x8xf32> -> vector<2x8x8xf32>
    "tpu.trace_stop"() : () -> ()
    %243 = vector.extract_strided_slice %187 {offsets = [0, 0, 24], sizes = [2, 8, 8], strides = [1, 1, 1]} : vector<2x8x32xf32> to vector<2x8x8xf32>
    %244 = vector.extract_strided_slice %189 {offsets = [0, 0, 24], sizes = [2, 8, 8], strides = [1, 1, 1]} : vector<2x8x32xf32> to vector<2x8x8xf32>
    %245 = vector.extract_strided_slice %191 {offsets = [0, 0, 24], sizes = [2, 8, 8], strides = [1, 1, 1]} : vector<2x8x32xf32> to vector<2x8x8xf32>
    "tpu.trace_start"() <{level = 10 : i32, message = "bqe,bke->bqk"}> : () -> ()
    %cst_84 = arith.constant dense<0.000000e+00> : vector<2x8x8xf32>
    %246 = tpu.matmul %243, %244, %cst_84 {dimension_numbers = #tpu.dot_dimension_numbers<[2], [2], [1], [1], [0, 0, 0, 1, 1, 1], [0], [0]>} : vector<2x8x8xf32>, vector<2x8x8xf32>, vector<2x8x8xf32> -> vector<2x8x8xf32>
    "tpu.trace_stop"() : () -> ()
    %cst_85 = arith.constant 0.353553385 : f32
    %247 = vector.broadcast %cst_85 : f32 to vector<2x8x8xf32>
    %248 = arith.mulf %246, %247 : vector<2x8x8xf32>
    %cst_86 = arith.constant dense<0xFF800000> : vector<2x8xf32>
    %249 = vector.multi_reduction <maximumf>, %248, %cst_86 [2] : vector<2x8x8xf32> to vector<2x8xf32>
    %250 = vector.shape_cast %249 : vector<2x8xf32> to vector<2x8x1xf32>
    %251 = vector.broadcast %250 : vector<2x8x1xf32> to vector<2x8x8xf32>
    %252 = arith.subf %248, %251 : vector<2x8x8xf32>
    %253 = math.exp %252 : vector<2x8x8xf32>
    %cst_87 = arith.constant dense<0.000000e+00> : vector<2x8xf32>
    %254 = vector.multi_reduction <add>, %253, %cst_87 [2] : vector<2x8x8xf32> to vector<2x8xf32>
    %255 = vector.shape_cast %254 : vector<2x8xf32> to vector<2x8x1xf32>
    %256 = tpu.reciprocal %255 {approx = true} : vector<2x8x1xf32> -> vector<2x8x1xf32>
    %257 = vector.broadcast %256 : vector<2x8x1xf32> to vector<2x8x8xf32>
    %258 = arith.mulf %253, %257 : vector<2x8x8xf32>
    "tpu.trace_start"() <{level = 10 : i32, message = "bqk,bke->bqe"}> : () -> ()
    %cst_88 = arith.constant dense<0.000000e+00> : vector<2x8x8xf32>
    %259 = tpu.matmul %258, %245, %cst_88 {dimension_numbers = #tpu.dot_dimension_numbers<[2], [1], [1], [2], [0, 0, 0, 1, 1, 2], [0], [0]>} : vector<2x8x8xf32>, vector<2x8x8xf32>, vector<2x8x8xf32> -> vector<2x8x8xf32>
    "tpu.trace_stop"() : () -> ()
    %260 = tpu.concatenate %208, %225, %242, %259 in 2 : vector<2x8x8xf32>, vector<2x8x8xf32>, vector<2x8x8xf32>, vector<2x8x8xf32> -> vector<2x8x32xf32>
    %261 = vector.shape_cast %260 : vector<2x8x32xf32> to vector<16x32xf32>
    %cst_89 = arith.constant dense<0.000000e+00> : vector<16x32xf32>
    %262 = tpu.matmul %261, %168, %cst_89 {dimension_numbers = #tpu.dot_dimension_numbers<[1], [0], [0], [1], [0, 0, 1, 1], [], []>} : vector<16x32xf32>, vector<32x32xf32>, vector<16x32xf32> -> vector<16x32xf32>
    %263 = vector.broadcast %176 : vector<1x32xf32> to vector<16x32xf32>
    %264 = arith.addf %262, %263 : vector<16x32xf32>
    %265 = arith.addf %164, %264 : vector<16x32xf32>
    %cst_90 = arith.constant dense<0.000000e+00> : vector<32xf32>
    %266 = vector.multi_reduction <add>, %265, %cst_90 [0] : vector<16x32xf32> to vector<32xf32>
    %267 = vector.shape_cast %266 : vector<32xf32> to vector<1x32xf32>
    %cst_91 = arith.constant 6.250000e-02 : f32
    %268 = vector.broadcast %cst_91 : f32 to vector<1x32xf32>
    %269 = arith.mulf %267, %268 : vector<1x32xf32>
    %270 = arith.mulf %265, %265 : vector<16x32xf32>
    %cst_92 = arith.constant dense<0.000000e+00> : vector<32xf32>
    %271 = vector.multi_reduction <add>, %270, %cst_92 [0] : vector<16x32xf32> to vector<32xf32>
    %272 = vector.shape_cast %271 : vector<32xf32> to vector<1x32xf32>
    %cst_93 = arith.constant 6.250000e-02 : f32
    %273 = vector.broadcast %cst_93 : f32 to vector<1x32xf32>
    %274 = arith.mulf %272, %273 : vector<1x32xf32>
    %275 = arith.mulf %269, %269 : vector<1x32xf32>
    %276 = arith.subf %274, %275 : vector<1x32xf32>
    %277 = vector.broadcast %269 : vector<1x32xf32> to vector<16x32xf32>
    %278 = arith.subf %265, %277 : vector<16x32xf32>
    %cst_94 = arith.constant 9.99999974E-6 : f32
    %279 = vector.broadcast %cst_94 : f32 to vector<1x32xf32>
    %280 = arith.addf %276, %279 : vector<1x32xf32>
    %281 = math.rsqrt %280 : vector<1x32xf32>
    %282 = arith.mulf %281, %179 : vector<1x32xf32>
    %283 = vector.broadcast %282 : vector<1x32xf32> to vector<16x32xf32>
    %284 = arith.mulf %278, %283 : vector<16x32xf32>
    %285 = vector.broadcast %180 : vector<1x32xf32> to vector<16x32xf32>
    %286 = arith.addf %284, %285 : vector<16x32xf32>
    %cst_95 = arith.constant dense<0.000000e+00> : vector<16x64xf32>
    %287 = tpu.matmul %286, %170, %cst_95 {dimension_numbers = #tpu.dot_dimension_numbers<[1], [0], [0], [1], [0, 0, 1, 1], [], []>} : vector<16x32xf32>, vector<32x64xf32>, vector<16x64xf32> -> vector<16x64xf32>
    %288 = vector.broadcast %177 : vector<1x64xf32> to vector<16x64xf32>
    %289 = arith.addf %287, %288 : vector<16x64xf32>
    %290 = arith.mulf %289, %289 : vector<16x64xf32>
    %291 = arith.mulf %289, %290 : vector<16x64xf32>
    %cst_96 = arith.constant 4.471500e-02 : f32
    %292 = vector.broadcast %cst_96 : f32 to vector<16x64xf32>
    %293 = arith.mulf %292, %291 : vector<16x64xf32>
    %294 = arith.addf %289, %293 : vector<16x64xf32>
    %cst_97 = arith.constant 0.797884583 : f32
    %295 = vector.broadcast %cst_97 : f32 to vector<16x64xf32>
    %296 = arith.mulf %295, %294 : vector<16x64xf32>
    %297 = math.tanh %296 : vector<16x64xf32>
    %cst_98 = arith.constant 1.000000e+00 : f32
    %298 = vector.broadcast %cst_98 : f32 to vector<16x64xf32>
    %299 = arith.addf %298, %297 : vector<16x64xf32>
    %cst_99 = arith.constant 5.000000e-01 : f32
    %300 = vector.broadcast %cst_99 : f32 to vector<16x64xf32>
    %301 = arith.mulf %300, %299 : vector<16x64xf32>
    %302 = arith.mulf %289, %301 : vector<16x64xf32>
    %cst_100 = arith.constant dense<0.000000e+00> : vector<16x32xf32>
    %303 = tpu.matmul %302, %172, %cst_100 {dimension_numbers = #tpu.dot_dimension_numbers<[1], [0], [0], [1], [0, 0, 1, 1], [], []>} : vector<16x64xf32>, vector<64x32xf32>, vector<16x32xf32> -> vector<16x32xf32>
    %304 = vector.broadcast %178 : vector<1x32xf32> to vector<16x32xf32>
    %305 = arith.addf %303, %304 : vector<16x32xf32>
    %306 = arith.addf %286, %305 : vector<16x32xf32>
    %cst_101 = arith.constant dense<0.000000e+00> : vector<32xf32>
    %307 = vector.multi_reduction <add>, %306, %cst_101 [0] : vector<16x32xf32> to vector<32xf32>
    %308 = vector.shape_cast %307 : vector<32xf32> to vector<1x32xf32>
    %cst_102 = arith.constant 6.250000e-02 : f32
    %309 = vector.broadcast %cst_102 : f32 to vector<1x32xf32>
    %310 = arith.mulf %308, %309 : vector<1x32xf32>
    %311 = arith.mulf %306, %306 : vector<16x32xf32>
    %cst_103 = arith.constant dense<0.000000e+00> : vector<32xf32>
    %312 = vector.multi_reduction <add>, %311, %cst_103 [0] : vector<16x32xf32> to vector<32xf32>
    %313 = vector.shape_cast %312 : vector<32xf32> to vector<1x32xf32>
    %cst_104 = arith.constant 6.250000e-02 : f32
    %314 = vector.broadcast %cst_104 : f32 to vector<1x32xf32>
    %315 = arith.mulf %313, %314 : vector<1x32xf32>
    %316 = arith.mulf %310, %310 : vector<1x32xf32>
    %317 = arith.subf %315, %316 : vector<1x32xf32>
    %318 = vector.broadcast %310 : vector<1x32xf32> to vector<16x32xf32>
    %319 = arith.subf %306, %318 : vector<16x32xf32>
    %cst_105 = arith.constant 9.99999974E-6 : f32
    %320 = vector.broadcast %cst_105 : f32 to vector<1x32xf32>
    %321 = arith.addf %317, %320 : vector<1x32xf32>
    %322 = math.rsqrt %321 : vector<1x32xf32>
    %323 = arith.mulf %322, %181 : vector<1x32xf32>
    %324 = vector.broadcast %323 : vector<1x32xf32> to vector<16x32xf32>
    %325 = arith.mulf %319, %324 : vector<16x32xf32>
    %326 = vector.broadcast %182 : vector<1x32xf32> to vector<16x32xf32>
    %327 = arith.addf %325, %326 : vector<16x32xf32>
    %328 = vector.shape_cast %327 : vector<16x32xf32> to vector<2x8x32xf32>
    %c0_106 = arith.constant 0 : index
    %c0_107 = arith.constant 0 : index
    %c0_108 = arith.constant 0 : index
    %329 = vector.load %arg6[%c0_106, %c0_107, %c0_108] : memref<2x8x32xf32, #tpu.memory_space<vmem>>, vector<2x8x32xf32>
    tpu.vector_store %arg6[%c0_106, %c0_107, %c0_108], %328 {strides = array<i32>} : memref<2x8x32xf32, #tpu.memory_space<vmem>>, vector<2x8x32xf32>,
    return
  }
}

</mosaic_0001>

<llo_original>
// kernel: tst_encoder.1
$region0: #{tst_encoder.1}
  #allocation0 [shape = 'u32[]', space=smem, size = 0x4, offset = 0x4, fixed_abs, tag = 'smem constant byte address 0x4 - core index']
  #allocation1 [shape = 'u32[72,128]{1,0:T(1,128)}', space=vmem, size = 0x9000, scoped, tag = 'internal scratch']
  %s0 = inlined_call_operand.hbm [shape: f32[2,8,32], index: 0, kind: input, shape index: {}]
  %s1 = inlined_call_operand.vmem [shape: f32[2,32,96], index: 1, kind: input, shape index: {}]
  %s2 = inlined_call_operand.vmem [shape: f32[2,32,32], index: 2, kind: input, shape index: {}]
  %s3 = inlined_call_operand.vmem [shape: f32[2,32,64], index: 3, kind: input, shape index: {}]
  %s4 = inlined_call_operand.vmem [shape: f32[2,64,32], index: 4, kind: input, shape index: {}]
  %s5 = inlined_call_operand.hbm [shape: f32[2,8,96], index: 5, kind: input, shape index: {}]
  %s6 = inlined_call_operand.hbm [shape: f32[2,8,32], index: 6, kind: output, shape index: {}]
  %s7 = sld [smem:[#allocation0]]
  $region42: #{tst_encoder.1} parent=0
    _
  %s9 = ssub.s32 1, %s7
  %s10 = scalar_select 0, %s9, %s7
  $region1: #{tst_encoder.1} parent=0
    #allocation2 [shape = 'u8[8192]{0}', space=vmem, size = 0x2000, scoped, tag = 'input window, operand 0, single buffered']
    #allocation3 [shape = 's32[1]{0}', space=sflag, size = 0x4, scoped, tag = 'scoped memory for tst_encoder.1']
    #allocation4 [shape = 's32[1]{0}', space=sflag, size = 0x4, scoped, tag = 'scoped memory for tst_encoder.1']
    #allocation5 [shape = 'u8[8192]{0}', space=vmem, size = 0x2000, scoped, tag = 'input window, operand 5, single buffered']
    #allocation6 [shape = 's32[1]{0}', space=sflag, size = 0x4, scoped, tag = 'scoped memory for tst_encoder.1']
    #allocation7 [shape = 'u8[8192]{0}', space=vmem, size = 0x2000, scoped, tag = 'output window, operand 0, single buffered']
    %11 = vsyncpa [#allocation3], 0
    %12 = vsyncpa [#allocation6], 0
    %13 = vsyncpa [#allocation4], 0
    // Predicated region
    $region2: #{tst_encoder.1} parent=1 // pred_check
      _
    $region3: #{tst_encoder.1} parent=1 // pred_check_branch
      %15 = sbr.rel (0) target = $region5
    $region4: #{tst_encoder.1} parent=1 // pred_region
      %17 = vsyncadd [#allocation3], 0
      %s18 = sshll.u32 %s0, 4
      %s19 = int_to_ptr.hbm [resolvable:$true] %s18
      %s20 = sshll.u32 [#allocation2], 4
      %s21 = int_to_ptr.vmem [resolvable:$true] %s20
      %26 = dma.hbm_to_vmem [thread:$0]  %s19, 256, %s21, [#allocation3], 128, 128, 8
    $region5: #{tst_encoder.1} parent=1 // pred_fallthru
      _
    // Predicated region
    $region6: #{tst_encoder.1} parent=1 // pred_check
      _
    $region7: #{tst_encoder.1} parent=1 // pred_check_branch
      %28 = sbr.rel (0) target = $region9
    $region8: #{tst_encoder.1} parent=1 // pred_region
      _
    $region9: #{tst_encoder.1} parent=1 // pred_fallthru
      _
    // Predicated region
    $region10: #{tst_encoder.1} parent=1 // pred_check
      _
    $region11: #{tst_encoder.1} parent=1 // pred_check_branch
      %30 = sbr.rel (0) target = $region13
    $region12: #{tst_encoder.1} parent=1 // pred_region
      _
    $region13: #{tst_encoder.1} parent=1 // pred_fallthru
      _
    // Predicated region
    $region14: #{tst_encoder.1} parent=1 // pred_check
      _
    $region15: #{tst_encoder.1} parent=1 // pred_check_branch
      %32 = sbr.rel (0) target = $region17
    $region16: #{tst_encoder.1} parent=1 // pred_region
      _
    $region17: #{tst_encoder.1} parent=1 // pred_fallthru
      _
    // Predicated region
    $region18: #{tst_encoder.1} parent=1 // pred_check
      _
    $region19: #{tst_encoder.1} parent=1 // pred_check_branch
      %34 = sbr.rel (0) target = $region21
    $region20: #{tst_encoder.1} parent=1 // pred_region
      _
    $region21: #{tst_encoder.1} parent=1 // pred_fallthru
      _
    // Predicated region
    $region22: #{tst_encoder.1} parent=1 // pred_check
      _
    $region23: #{tst_encoder.1} parent=1 // pred_check_branch
      %36 = sbr.rel (0) target = $region25
    $region24: #{tst_encoder.1} parent=1 // pred_region
      %38 = vsyncadd [#allocation6], 0
      %s39 = sshll.u32 %s5, 4
      %s40 = int_to_ptr.hbm [resolvable:$true] %s39
      %s41 = sshll.u32 [#allocation5], 4
      %s42 = int_to_ptr.vmem [resolvable:$true] %s41
      %47 = dma.hbm_to_vmem [thread:$0]  %s40, 256, %s42, [#allocation6], 128, 128, 8
    $region25: #{tst_encoder.1} parent=1 // pred_fallthru
      _
    // Predicated region
    $region26: #{tst_encoder.1} parent=1 // pred_check
      _
    $region27: #{tst_encoder.1} parent=1 // pred_check_branch
      %49 = sbr.rel (0) target = $region29
    $region28: #{tst_encoder.1} parent=1 // pred_region
      %51 = dma.done [#allocation3], 256
    $region29: #{tst_encoder.1} parent=1 // pred_fallthru
      _
    // Predicated region
    $region30: #{tst_encoder.1} parent=1 // pred_check
      _
    $region31: #{tst_encoder.1} parent=1 // pred_check_branch
      %53 = sbr.rel (0) target = $region33
    $region32: #{tst_encoder.1} parent=1 // pred_region
      %55 = dma.done [#allocation6], 256
    $region33: #{tst_encoder.1} parent=1 // pred_fallthru
      _
    %v56 = vld [vmem:[#allocation2] sm:$0xff]
    %v57 = vld [vmem:[#allocation2 + $0x8] sm:$0xff]
    %v58 = vld [vmem:[%s1] sm:$0xff]
    %v59 = vld [vmem:[%s1 + $0x8] sm:$0xff]
    %v60 = vld [vmem:[%s1 + $0x10] sm:$0xff]
    %v61 = vld [vmem:[%s1 + $0x18] sm:$0xff]
    %v62 = vld [vmem:[%s2] sm:$0xff]
    %v63 = vld [vmem:[%s2 + $0x8] sm:$0xff]
    %v64 = vld [vmem:[%s2 + $0x10] sm:$0xff]
    %v65 = vld [vmem:[%s2 + $0x18] sm:$0xff]
    %v66 = vld [vmem:[%s3] sm:$0xff]
    %v67 = vld [vmem:[%s3 + $0x8] sm:$0xff]
    %v68 = vld [vmem:[%s3 + $0x10] sm:$0xff]
    %v69 = vld [vmem:[%s3 + $0x18] sm:$0xff]
    %v70 = vld [vmem:[%s4] sm:$0xff]
    %v71 = vld [vmem:[%s4 + $0x8] sm:$0xff]
    %v72 = vld [vmem:[%s4 + $0x10] sm:$0xff]
    %v73 = vld [vmem:[%s4 + $0x18] sm:$0xff]
    %v74 = vld [vmem:[%s4 + $0x20] sm:$0xff]
    %v75 = vld [vmem:[%s4 + $0x28] sm:$0xff]
    %v76 = vld [vmem:[%s4 + $0x30] sm:$0xff]
    %v77 = vld [vmem:[%s4 + $0x38] sm:$0xff]
    %v78 = vld [vmem:[#allocation5] sm:$0xff]
    %v79 = vperm.slane %v78, 0
    %vm80 = vcmask 261120
    %v82 = vsel %vm80, %v56, 0
    %v85 = vsel %vm80, %v57, 0
    %87 = vmatpush.msra.mxu0 0.0
    %88 = vmatpush.msra.mxu0 0.0
    %89 = vmatpush.msra.mxu0 0.0
    %90 = vmatpush.msra.mxu0 0.0
    %91 = vmatpush.msra.mxu0 0.0
    %92 = vmatpush.msra.mxu0 0.0
    %93 = vmatpush.msra.mxu0 0.0
    %94 = vmatpush.msra.mxu0 0.0
    %95 = vmatpush.msra.mxu0 0.0
    %96 = vmatpush.msra.mxu0 0.0
    %97 = vmatpush.msra.mxu0 0.0
    %98 = vmatpush.msra.mxu0 0.0
    %99 = vmatpush.msra.mxu0 %v61
    %100 = vmatpush.msra.mxu0 %v60
    %101 = vmatpush.msra.mxu0 %v59
    %102 = vmatpush.msra.mxu0 %v58
    %103 = vmatmul.f32.gmra.mxu0 %v82
    %v104 = vpop.f32.mrf.mxu0
    %v105 = vadd.f32 %v79, %v104
    %106 = vmatmul.f32.gmra.mxu0 %v85
    %v107 = vpop.f32.mrf.mxu0
    %v108 = vadd.f32 %v79, %v107
    %109 = vdwg.mxu0
    %111 = vrot.lane.b32.xlu0 %v105, 96
    %v112 = vpop.permute.xlu0 %111
    %vm113 = vcmask 64512
    %v114 = vsel %vm113, %v105, 0
    %v116 = vsel %vm113, %v112, 0
    %118 = vmatpush.xpose.msra.mxu0 0.0
    %119 = vmatpush.xpose.msra.mxu0 0.0
    %120 = vmatpush.xpose.msra.mxu0 0.0
    %121 = vmatpush.xpose.msra.mxu0 0.0
    %122 = vmatpush.xpose.msra.mxu0 0.0
    %123 = vmatpush.xpose.msra.mxu0 0.0
    %124 = vmatpush.xpose.msra.mxu0 0.0
    %125 = vmatpush.xpose.msra.mxu0 0.0
    %126 = vmatpush.xpose.msra.mxu0 0.0
    %127 = vmatpush.xpose.msra.mxu0 0.0
    %128 = vmatpush.xpose.msra.mxu0 0.0
    %129 = vmatpush.xpose.msra.mxu0 0.0
    %130 = vmatpush.xpose.msra.mxu0 0.0
    %131 = vmatpush.xpose.msra.mxu0 0.0
    %132 = vmatpush.xpose.msra.mxu0 0.0
    %133 = vmatpush.xpose.msra.mxu0 %v116
    %134 = vmatmul.f32.gmra.mxu0 %v114
    %v135 = vpop.f32.mrf.mxu0
    %v136 = vadd.f32 0.0, %v135
    %137 = vdwg.mxu0
    %139 = vrot.lane.b32.xlu0 %v108, 96
    %v140 = vpop.permute.xlu0 %139
    %v141 = vsel %vm113, %v108, 0
    %v143 = vsel %vm113, %v140, 0
    %145 = vmatpush.xpose.msra.mxu0 0.0
    %146 = vmatpush.xpose.msra.mxu0 0.0
    %147 = vmatpush.xpose.msra.mxu0 0.0
    %148 = vmatpush.xpose.msra.mxu0 0.0
    %149 = vmatpush.xpose.msra.mxu0 0.0
    %150 = vmatpush.xpose.msra.mxu0 0.0
    %151 = vmatpush.xpose.msra.mxu0 0.0
    %152 = vmatpush.xpose.msra.mxu0 0.0
    %153 = vmatpush.xpose.msra.mxu0 0.0
    %154 = vmatpush.xpose.msra.mxu0 0.0
    %155 = vmatpush.xpose.msra.mxu0 0.0
    %156 = vmatpush.xpose.msra.mxu0 0.0
    %157 = vmatpush.xpose.msra.mxu0 0.0
    %158 = vmatpush.xpose.msra.mxu0 0.0
    %159 = vmatpush.xpose.msra.mxu0 0.0
    %160 = vmatpush.xpose.msra.mxu0 %v143
    %161 = vmatmul.f32.gmra.mxu0 %v141
    %v162 = vpop.f32.mrf.mxu0
    %v163 = vadd.f32 0.0, %v162
    %164 = vdwg.mxu0
    %v165 = vmul.f32 %v136, 0.35355338
    %v166 = vmul.f32 %v163, 0.35355338
    %v167 = vsel %vm113, %v165, -inf
    %168 = vmax.xlane.f32.xlu0 %v167
    %v169 = vpop.xlane.xlu0 %168
    %v170 = vsel %vm113, %v166, -inf
    %171 = vmax.xlane.f32.xlu0 %v170
    %v172 = vpop.xlane.xlu0 %171
    %v173 = vsub.f32 %v165, %v169
    %v174 = vsub.f32 %v166, %v172
    %v175 = vmul.f32 %v173, 1.442695
    %v176 = vpow.pop %v175
    %v177 = vmul.f32 %v174, 1.442695
    %v178 = vpow.pop %v177
    %v179 = vsel %vm113, %v176, 0.0
    %180 = vadd.xlane.f32.xlu0 %v179
    %v181 = vpop.xlane.xlu0 %180
    %v182 = vsel %vm113, %v178, 0.0
    %183 = vadd.xlane.f32.xlu0 %v182
    %v184 = vpop.xlane.xlu0 %183
    %v185 = vrcp.pop %v181
    %v186 = vrcp.pop %v184
    %v187 = vmul.f32 %v176, %v185
    %v188 = vmul.f32 %v178, %v186
    %189 = vrot.lane.b32.xlu0 %v105, 64
    %v190 = vpop.permute.xlu0 %189
    %v193 = vsel %vm113, %v187, 0
    %195 = vmatpush.msra.mxu0 0.0
    %196 = vmatpush.msra.mxu0 0.0
    %197 = vmatpush.msra.mxu0 0.0
    %198 = vmatpush.msra.mxu0 0.0
    %199 = vmatpush.msra.mxu0 0.0
    %200 = vmatpush.msra.mxu0 0.0
    %201 = vmatpush.msra.mxu0 0.0
    %202 = vmatpush.msra.mxu0 0.0
    %203 = vmatpush.msra.mxu0 0.0
    %204 = vmatpush.msra.mxu0 0.0
    %205 = vmatpush.msra.mxu0 0.0
    %206 = vmatpush.msra.mxu0 0.0
    %207 = vmatpush.msra.mxu0 0.0
    %208 = vmatpush.msra.mxu0 0.0
    %209 = vmatpush.msra.mxu0 0.0
    %210 = vmatpush.msra.mxu0 %v190
    %211 = vmatmul.f32.gmra.mxu0 %v193
    %v212 = vpop.f32.mrf.mxu0
    %v213 = vadd.f32 0.0, %v212
    %214 = vdwg.mxu0
    %215 = vrot.lane.b32.xlu0 %v108, 64
    %v216 = vpop.permute.xlu0 %215
    %v219 = vsel %vm113, %v188, 0
    %221 = vmatpush.msra.mxu0 0.0
    %222 = vmatpush.msra.mxu0 0.0
    %223 = vmatpush.msra.mxu0 0.0
    %224 = vmatpush.msra.mxu0 0.0
    %225 = vmatpush.msra.mxu0 0.0
    %226 = vmatpush.msra.mxu0 0.0
    %227 = vmatpush.msra.mxu0 0.0
    %228 = vmatpush.msra.mxu0 0.0
    %229 = vmatpush.msra.mxu0 0.0
    %230 = vmatpush.msra.mxu0 0.0
    %231 = vmatpush.msra.mxu0 0.0
    %232 = vmatpush.msra.mxu0 0.0
    %233 = vmatpush.msra.mxu0 0.0
    %234 = vmatpush.msra.mxu0 0.0
    %235 = vmatpush.msra.mxu0 0.0
    %236 = vmatpush.msra.mxu0 %v216
    %237 = vmatmul.f32.gmra.mxu0 %v219
    %v238 = vpop.f32.mrf.mxu0
    %v239 = vadd.f32 0.0, %v238
    %240 = vdwg.mxu0
    %241 = vrot.lane.b32.xlu0 %v105, 120
    %v242 = vpop.permute.xlu0 %241
    %243 = vrot.lane.b32.xlu0 %v105, 88
    %v244 = vpop.permute.xlu0 %243
    %v245 = vsel %vm113, %v242, 0
    %v247 = vsel %vm113, %v244, 0
    %249 = vmatpush.xpose.msra.mxu0 0.0
    %250 = vmatpush.xpose.msra.mxu0 0.0
    %251 = vmatpush.xpose.msra.mxu0 0.0
    %252 = vmatpush.xpose.msra.mxu0 0.0
    %253 = vmatpush.xpose.msra.mxu0 0.0
    %254 = vmatpush.xpose.msra.mxu0 0.0
    %255 = vmatpush.xpose.msra.mxu0 0.0
    %256 = vmatpush.xpose.msra.mxu0 0.0
    %257 = vmatpush.xpose.msra.mxu0 0.0
    %258 = vmatpush.xpose.msra.mxu0 0.0
    %259 = vmatpush.xpose.msra.mxu0 0.0
    %260 = vmatpush.xpose.msra.mxu0 0.0
    %261 = vmatpush.xpose.msra.mxu0 0.0
    %262 = vmatpush.xpose.msra.mxu0 0.0
    %263 = vmatpush.xpose.msra.mxu0 0.0
    %264 = vmatpush.xpose.msra.mxu0 %v247
    %265 = vmatmul.f32.gmra.mxu0 %v245
    %v266 = vpop.f32.mrf.mxu0
    %v267 = vadd.f32 0.0, %v266
    %268 = vdwg.mxu0
    %269 = vrot.lane.b32.xlu0 %v108, 120
    %v270 = vpop.permute.xlu0 %269
    %271 = vrot.lane.b32.xlu0 %v108, 88
    %v272 = vpop.permute.xlu0 %271
    %v273 = vsel %vm113, %v270, 0
    %v275 = vsel %vm113, %v272, 0
    %277 = vmatpush.xpose.msra.mxu0 0.0
    %278 = vmatpush.xpose.msra.mxu0 0.0
    %279 = vmatpush.xpose.msra.mxu0 0.0
    %280 = vmatpush.xpose.msra.mxu0 0.0
    %281 = vmatpush.xpose.msra.mxu0 0.0
    %282 = vmatpush.xpose.msra.mxu0 0.0
    %283 = vmatpush.xpose.msra.mxu0 0.0
    %284 = vmatpush.xpose.msra.mxu0 0.0
    %285 = vmatpush.xpose.msra.mxu0 0.0
    %286 = vmatpush.xpose.msra.mxu0 0.0
    %287 = vmatpush.xpose.msra.mxu0 0.0
    %288 = vmatpush.xpose.msra.mxu0 0.0
    %289 = vmatpush.xpose.msra.mxu0 0.0
    %290 = vmatpush.xpose.msra.mxu0 0.0
    %291 = vmatpush.xpose.msra.mxu0 0.0
    %292 = vmatpush.xpose.msra.mxu0 %v275
    %293 = vmatmul.f32.gmra.mxu0 %v273
    %v294 = vpop.f32.mrf.mxu0
    %v295 = vadd.f32 0.0, %v294
    %296 = vdwg.mxu0
    %v297 = vmul.f32 %v267, 0.35355338
    %v298 = vmul.f32 %v295, 0.35355338
    %v299 = vsel %vm113, %v297, -inf
    %300 = vmax.xlane.f32.xlu0 %v299
    %v301 = vpop.xlane.xlu0 %300
    %v302 = vsel %vm113, %v298, -inf
    %303 = vmax.xlane.f32.xlu0 %v302
    %v304 = vpop.xlane.xlu0 %303
    %v305 = vsub.f32 %v297, %v301
    %v306 = vsub.f32 %v298, %v304
    %v307 = vmul.f32 %v305, 1.442695
    %v308 = vpow.pop %v307
    %v309 = vmul.f32 %v306, 1.442695
    %v310 = vpow.pop %v309
    %v311 = vsel %vm113, %v308, 0.0
    %312 = vadd.xlane.f32.xlu0 %v311
    %v313 = vpop.xlane.xlu0 %312
    %v314 = vsel %vm113, %v310, 0.0
    %315 = vadd.xlane.f32.xlu0 %v314
    %v316 = vpop.xlane.xlu0 %315
    %v317 = vrcp.pop %v313
    %v318 = vrcp.pop %v316
    %v319 = vmul.f32 %v308, %v317
    %v320 = vmul.f32 %v310, %v318
    %321 = vrot.lane.b32.xlu0 %v105, 56
    %v322 = vpop.permute.xlu0 %321
    %v325 = vsel %vm113, %v319, 0
    %327 = vmatpush.msra.mxu0 0.0
    %328 = vmatpush.msra.mxu0 0.0
    %329 = vmatpush.msra.mxu0 0.0
    %330 = vmatpush.msra.mxu0 0.0
    %331 = vmatpush.msra.mxu0 0.0
    %332 = vmatpush.msra.mxu0 0.0
    %333 = vmatpush.msra.mxu0 0.0
    %334 = vmatpush.msra.mxu0 0.0
    %335 = vmatpush.msra.mxu0 0.0
    %336 = vmatpush.msra.mxu0 0.0
    %337 = vmatpush.msra.mxu0 0.0
    %338 = vmatpush.msra.mxu0 0.0
    %339 = vmatpush.msra.mxu0 0.0
    %340 = vmatpush.msra.mxu0 0.0
    %341 = vmatpush.msra.mxu0 0.0
    %342 = vmatpush.msra.mxu0 %v322
    %343 = vmatmul.f32.gmra.mxu0 %v325
    %v344 = vpop.f32.mrf.mxu0
    %v345 = vadd.f32 0.0, %v344
    %346 = vdwg.mxu0
    %347 = vrot.lane.b32.xlu0 %v108, 56
    %v348 = vpop.permute.xlu0 %347
    %v351 = vsel %vm113, %v320, 0
    %353 = vmatpush.msra.mxu0 0.0
    %354 = vmatpush.msra.mxu0 0.0
    %355 = vmatpush.msra.mxu0 0.0
    %356 = vmatpush.msra.mxu0 0.0
    %357 = vmatpush.msra.mxu0 0.0
    %358 = vmatpush.msra.mxu0 0.0
    %359 = vmatpush.msra.mxu0 0.0
    %360 = vmatpush.msra.mxu0 0.0
    %361 = vmatpush.msra.mxu0 0.0
    %362 = vmatpush.msra.mxu0 0.0
    %363 = vmatpush.msra.mxu0 0.0
    %364 = vmatpush.msra.mxu0 0.0
    %365 = vmatpush.msra.mxu0 0.0
    %366 = vmatpush.msra.mxu0 0.0
    %367 = vmatpush.msra.mxu0 0.0
    %368 = vmatpush.msra.mxu0 %v348
    %369 = vmatmul.f32.gmra.mxu0 %v351
    %v370 = vpop.f32.mrf.mxu0
    %v371 = vadd.f32 0.0, %v370
    %372 = vdwg.mxu0
    %373 = vrot.lane.b32.xlu0 %v105, 112
    %v374 = vpop.permute.xlu0 %373
    %375 = vrot.lane.b32.xlu0 %v105, 80
    %v376 = vpop.permute.xlu0 %375
    %v377 = vsel %vm113, %v374, 0
    %v379 = vsel %vm113, %v376, 0
    %381 = vmatpush.xpose.msra.mxu0 0.0
    %382 = vmatpush.xpose.msra.mxu0 0.0
    %383 = vmatpush.xpose.msra.mxu0 0.0
    %384 = vmatpush.xpose.msra.mxu0 0.0
    %385 = vmatpush.xpose.msra.mxu0 0.0
    %386 = vmatpush.xpose.msra.mxu0 0.0
    %387 = vmatpush.xpose.msra.mxu0 0.0
    %388 = vmatpush.xpose.msra.mxu0 0.0
    %389 = vmatpush.xpose.msra.mxu0 0.0
    %390 = vmatpush.xpose.msra.mxu0 0.0
    %391 = vmatpush.xpose.msra.mxu0 0.0
    %392 = vmatpush.xpose.msra.mxu0 0.0
    %393 = vmatpush.xpose.msra.mxu0 0.0
    %394 = vmatpush.xpose.msra.mxu0 0.0
    %395 = vmatpush.xpose.msra.mxu0 0.0
    %396 = vmatpush.xpose.msra.mxu0 %v379
    %397 = vmatmul.f32.gmra.mxu0 %v377
    %v398 = vpop.f32.mrf.mxu0
    %v399 = vadd.f32 0.0, %v398
    %400 = vdwg.mxu0
    %401 = vrot.lane.b32.xlu0 %v108, 112
    %v402 = vpop.permute.xlu0 %401
    %403 = vrot.lane.b32.xlu0 %v108, 80
    %v404 = vpop.permute.xlu0 %403
    %v405 = vsel %vm113, %v402, 0
    %v407 = vsel %vm113, %v404, 0
    %409 = vmatpush.xpose.msra.mxu0 0.0
    %410 = vmatpush.xpose.msra.mxu0 0.0
    %411 = vmatpush.xpose.msra.mxu0 0.0
    %412 = vmatpush.xpose.msra.mxu0 0.0
    %413 = vmatpush.xpose.msra.mxu0 0.0
    %414 = vmatpush.xpose.msra.mxu0 0.0
    %415 = vmatpush.xpose.msra.mxu0 0.0
    %416 = vmatpush.xpose.msra.mxu0 0.0
    %417 = vmatpush.xpose.msra.mxu0 0.0
    %418 = vmatpush.xpose.msra.mxu0 0.0
    %419 = vmatpush.xpose.msra.mxu0 0.0
    %420 = vmatpush.xpose.msra.mxu0 0.0
    %421 = vmatpush.xpose.msra.mxu0 0.0
    %422 = vmatpush.xpose.msra.mxu0 0.0
    %423 = vmatpush.xpose.msra.mxu0 0.0
    %424 = vmatpush.xpose.msra.mxu0 %v407
    %425 = vmatmul.f32.gmra.mxu0 %v405
    %v426 = vpop.f32.mrf.mxu0
    %v427 = vadd.f32 0.0, %v426
    %428 = vdwg.mxu0
    %v429 = vmul.f32 %v399, 0.35355338
    %v430 = vmul.f32 %v427, 0.35355338
    %v431 = vsel %vm113, %v429, -inf
    %432 = vmax.xlane.f32.xlu0 %v431
    %v433 = vpop.xlane.xlu0 %432
    %v434 = vsel %vm113, %v430, -inf
    %435 = vmax.xlane.f32.xlu0 %v434
    %v436 = vpop.xlane.xlu0 %435
    %v437 = vsub.f32 %v429, %v433
    %v438 = vsub.f32 %v430, %v436
    %v439 = vmul.f32 %v437, 1.442695
    %v440 = vpow.pop %v439
    %v441 = vmul.f32 %v438, 1.442695
    %v442 = vpow.pop %v441
    %v443 = vsel %vm113, %v440, 0.0
    %444 = vadd.xlane.f32.xlu0 %v443
    %v445 = vpop.xlane.xlu0 %444
    %v446 = vsel %vm113, %v442, 0.0
    %447 = vadd.xlane.f32.xlu0 %v446
    %v448 = vpop.xlane.xlu0 %447
    %v449 = vrcp.pop %v445
    %v450 = vrcp.pop %v448
    %v451 = vmul.f32 %v440, %v449
    %v452 = vmul.f32 %v442, %v450
    %453 = vrot.lane.b32.xlu0 %v105, 48
    %v454 = vpop.permute.xlu0 %453
    %v457 = vsel %vm113, %v451, 0
    %459 = vmatpush.msra.mxu0 0.0
    %460 = vmatpush.msra.mxu0 0.0
    %461 = vmatpush.msra.mxu0 0.0
    %462 = vmatpush.msra.mxu0 0.0
    %463 = vmatpush.msra.mxu0 0.0
    %464 = vmatpush.msra.mxu0 0.0
    %465 = vmatpush.msra.mxu0 0.0
    %466 = vmatpush.msra.mxu0 0.0
    %467 = vmatpush.msra.mxu0 0.0
    %468 = vmatpush.msra.mxu0 0.0
    %469 = vmatpush.msra.mxu0 0.0
    %470 = vmatpush.msra.mxu0 0.0
    %471 = vmatpush.msra.mxu0 0.0
    %472 = vmatpush.msra.mxu0 0.0
    %473 = vmatpush.msra.mxu0 0.0
    %474 = vmatpush.msra.mxu0 %v454
    %475 = vmatmul.f32.gmra.mxu0 %v457
    %v476 = vpop.f32.mrf.mxu0
    %v477 = vadd.f32 0.0, %v476
    %478 = vdwg.mxu0
    %479 = vrot.lane.b32.xlu0 %v108, 48
    %v480 = vpop.permute.xlu0 %479
    %v483 = vsel %vm113, %v452, 0
    %485 = vmatpush.msra.mxu0 0.0
    %486 = vmatpush.msra.mxu0 0.0
    %487 = vmatpush.msra.mxu0 0.0
    %488 = vmatpush.msra.mxu0 0.0
    %489 = vmatpush.msra.mxu0 0.0
    %490 = vmatpush.msra.mxu0 0.0
    %491 = vmatpush.msra.mxu0 0.0
    %492 = vmatpush.msra.mxu0 0.0
    %493 = vmatpush.msra.mxu0 0.0
    %494 = vmatpush.msra.mxu0 0.0
    %495 = vmatpush.msra.mxu0 0.0
    %496 = vmatpush.msra.mxu0 0.0
    %497 = vmatpush.msra.mxu0 0.0
    %498 = vmatpush.msra.mxu0 0.0
    %499 = vmatpush.msra.mxu0 0.0
    %500 = vmatpush.msra.mxu0 %v480
    %501 = vmatmul.f32.gmra.mxu0 %v483
    %v502 = vpop.f32.mrf.mxu0
    %v503 = vadd.f32 0.0, %v502
    %504 = vdwg.mxu0
    %505 = vrot.lane.b32.xlu0 %v105, 104
    %v506 = vpop.permute.xlu0 %505
    %507 = vrot.lane.b32.xlu0 %v105, 72
    %v508 = vpop.permute.xlu0 %507
    %v509 = vsel %vm113, %v506, 0
    %v511 = vsel %vm113, %v508, 0
    %513 = vmatpush.xpose.msra.mxu0 0.0
    %514 = vmatpush.xpose.msra.mxu0 0.0
    %515 = vmatpush.xpose.msra.mxu0 0.0
    %516 = vmatpush.xpose.msra.mxu0 0.0
    %517 = vmatpush.xpose.msra.mxu0 0.0
    %518 = vmatpush.xpose.msra.mxu0 0.0
    %519 = vmatpush.xpose.msra.mxu0 0.0
    %520 = vmatpush.xpose.msra.mxu0 0.0
    %521 = vmatpush.xpose.msra.mxu0 0.0
    %522 = vmatpush.xpose.msra.mxu0 0.0
    %523 = vmatpush.xpose.msra.mxu0 0.0
    %524 = vmatpush.xpose.msra.mxu0 0.0
    %525 = vmatpush.xpose.msra.mxu0 0.0
    %526 = vmatpush.xpose.msra.mxu0 0.0
    %527 = vmatpush.xpose.msra.mxu0 0.0
    %528 = vmatpush.xpose.msra.mxu0 %v511
    %529 = vmatmul.f32.gmra.mxu0 %v509
    %v530 = vpop.f32.mrf.mxu0
    %v531 = vadd.f32 0.0, %v530
    %532 = vdwg.mxu0
    %533 = vrot.lane.b32.xlu0 %v108, 104
    %v534 = vpop.permute.xlu0 %533
    %535 = vrot.lane.b32.xlu0 %v108, 72
    %v536 = vpop.permute.xlu0 %535
    %v537 = vsel %vm113, %v534, 0
    %v539 = vsel %vm113, %v536, 0
    %541 = vmatpush.xpose.msra.mxu0 0.0
    %542 = vmatpush.xpose.msra.mxu0 0.0
    %543 = vmatpush.xpose.msra.mxu0 0.0
    %544 = vmatpush.xpose.msra.mxu0 0.0
    %545 = vmatpush.xpose.msra.mxu0 0.0
    %546 = vmatpush.xpose.msra.mxu0 0.0
    %547 = vmatpush.xpose.msra.mxu0 0.0
    %548 = vmatpush.xpose.msra.mxu0 0.0
    %549 = vmatpush.xpose.msra.mxu0 0.0
    %550 = vmatpush.xpose.msra.mxu0 0.0
    %551 = vmatpush.xpose.msra.mxu0 0.0
    %552 = vmatpush.xpose.msra.mxu0 0.0
    %553 = vmatpush.xpose.msra.mxu0 0.0
    %554 = vmatpush.xpose.msra.mxu0 0.0
    %555 = vmatpush.xpose.msra.mxu0 0.0
    %556 = vmatpush.xpose.msra.mxu0 %v539
    %557 = vmatmul.f32.gmra.mxu0 %v537
    %v558 = vpop.f32.mrf.mxu0
    %v559 = vadd.f32 0.0, %v558
    %560 = vdwg.mxu0
    %v561 = vmul.f32 %v531, 0.35355338
    %v562 = vmul.f32 %v559, 0.35355338
    %v563 = vsel %vm113, %v561, -inf
    %564 = vmax.xlane.f32.xlu0 %v563
    %v565 = vpop.xlane.xlu0 %564
    %v566 = vsel %vm113, %v562, -inf
    %567 = vmax.xlane.f32.xlu0 %v566
    %v568 = vpop.xlane.xlu0 %567
    %v569 = vsub.f32 %v561, %v565
    %v570 = vsub.f32 %v562, %v568
    %v571 = vmul.f32 %v569, 1.442695
    %v572 = vpow.pop %v571
    %v573 = vmul.f32 %v570, 1.442695
    %v574 = vpow.pop %v573
    %v575 = vsel %vm113, %v572, 0.0
    %576 = vadd.xlane.f32.xlu0 %v575
    %v577 = vpop.xlane.xlu0 %576
    %v578 = vsel %vm113, %v574, 0.0
    %579 = vadd.xlane.f32.xlu0 %v578
    %v580 = vpop.xlane.xlu0 %579
    %v581 = vrcp.pop %v577
    %v582 = vrcp.pop %v580
    %v583 = vmul.f32 %v572, %v581
    %v584 = vmul.f32 %v574, %v582
    %585 = vrot.lane.b32.xlu0 %v105, 40
    %v586 = vpop.permute.xlu0 %585
    %v589 = vsel %vm113, %v583, 0
    %591 = vmatpush.msra.mxu0 0.0
    %592 = vmatpush.msra.mxu0 0.0
    %593 = vmatpush.msra.mxu0 0.0
    %594 = vmatpush.msra.mxu0 0.0
    %595 = vmatpush.msra.mxu0 0.0
    %596 = vmatpush.msra.mxu0 0.0
    %597 = vmatpush.msra.mxu0 0.0
    %598 = vmatpush.msra.mxu0 0.0
    %599 = vmatpush.msra.mxu0 0.0
    %600 = vmatpush.msra.mxu0 0.0
    %601 = vmatpush.msra.mxu0 0.0
    %602 = vmatpush.msra.mxu0 0.0
    %603 = vmatpush.msra.mxu0 0.0
    %604 = vmatpush.msra.mxu0 0.0
    %605 = vmatpush.msra.mxu0 0.0
    %606 = vmatpush.msra.mxu0 %v586
    %607 = vmatmul.f32.gmra.mxu0 %v589
    %v608 = vpop.f32.mrf.mxu0
    %v609 = vadd.f32 0.0, %v608
    %610 = vdwg.mxu0
    %611 = vrot.lane.b32.xlu0 %v108, 40
    %v612 = vpop.permute.xlu0 %611
    %v615 = vsel %vm113, %v584, 0
    %617 = vmatpush.msra.mxu0 0.0
    %618 = vmatpush.msra.mxu0 0.0
    %619 = vmatpush.msra.mxu0 0.0
    %620 = vmatpush.msra.mxu0 0.0
    %621 = vmatpush.msra.mxu0 0.0
    %622 = vmatpush.msra.mxu0 0.0
    %623 = vmatpush.msra.mxu0 0.0
    %624 = vmatpush.msra.mxu0 0.0
    %625 = vmatpush.msra.mxu0 0.0
    %626 = vmatpush.msra.mxu0 0.0
    %627 = vmatpush.msra.mxu0 0.0
    %628 = vmatpush.msra.mxu0 0.0
    %629 = vmatpush.msra.mxu0 0.0
    %630 = vmatpush.msra.mxu0 0.0
    %631 = vmatpush.msra.mxu0 0.0
    %632 = vmatpush.msra.mxu0 %v612
    %633 = vmatmul.f32.gmra.mxu0 %v615
    %v634 = vpop.f32.mrf.mxu0
    %v635 = vadd.f32 0.0, %v634
    %636 = vdwg.mxu0
    %639 = vrot.lane.b32.xlu0 %v345, 8
    %v640 = vpop.permute.xlu0 %639
    %641 = vrot.lane.b32.xlu0 %v371, 8
    %v642 = vpop.permute.xlu0 %641
    %647 = vrot.lane.b32.xlu0 %v477, 16
    %v648 = vpop.permute.xlu0 %647
    %649 = vrot.lane.b32.xlu0 %v503, 16
    %v650 = vpop.permute.xlu0 %649
    %655 = vrot.lane.b32.xlu0 %v609, 24
    %v656 = vpop.permute.xlu0 %655
    %657 = vrot.lane.b32.xlu0 %v635, 24
    %v658 = vpop.permute.xlu0 %657
    %v661 = vsel %vm113, %v213, %v640
    %v662 = vsel %vm113, %v239, %v642
    %vm663 = vcmask 130048
    %v664 = vsel %vm663, %v661, %v648
    %v665 = vsel %vm663, %v662, %v650
    %vm666 = vcmask 195584
    %v667 = vsel %vm666, %v664, %v656
    %v668 = vsel %vm666, %v665, %v658
    %v669 = vperm.slane %v78, 1
    %v671 = vsel %vm80, %v667, 0
    %v674 = vsel %vm80, %v668, 0
    %676 = vmatpush.msra.mxu0 0.0
    %677 = vmatpush.msra.mxu0 0.0
    %678 = vmatpush.msra.mxu0 0.0
    %679 = vmatpush.msra.mxu0 0.0
    %680 = vmatpush.msra.mxu0 0.0
    %681 = vmatpush.msra.mxu0 0.0
    %682 = vmatpush.msra.mxu0 0.0
    %683 = vmatpush.msra.mxu0 0.0
    %684 = vmatpush.msra.mxu0 0.0
    %685 = vmatpush.msra.mxu0 0.0
    %686 = vmatpush.msra.mxu0 0.0
    %687 = vmatpush.msra.mxu0 0.0
    %688 = vmatpush.msra.mxu0 %v65
    %689 = vmatpush.msra.mxu0 %v64
    %690 = vmatpush.msra.mxu0 %v63
    %691 = vmatpush.msra.mxu0 %v62
    %692 = vmatmul.f32.gmra.mxu0 %v671
    %v693 = vpop.f32.mrf.mxu0
    %v694 = vadd.f32 %v669, %v693
    %695 = vmatmul.f32.gmra.mxu0 %v674
    %v696 = vpop.f32.mrf.mxu0
    %v697 = vadd.f32 %v669, %v696
    %698 = vdwg.mxu0
    %v699 = vadd.f32 %v56, %v694
    %v700 = vadd.f32 %v57, %v697
    %v701 = vsel %vm80, %v699, 0.0
    %v702 = vsel %vm80, %v700, 0.0
    %v703 = vadd.f32 %v701, %v702
    %v704 = vrot.slane %v703, 4
    %v705 = vadd.f32 %v703, %v704
    %v706 = vrot.slane %v705, 2
    %v707 = vadd.f32 %v705, %v706
    %v708 = vrot.slane %v707, 1
    %v709 = vadd.f32 %v707, %v708
    %v710 = vmul.f32 %v709, 0.0625
    %v711 = vmul.f32 %v699, %v699
    %v712 = vmul.f32 %v700, %v700
    %v713 = vsel %vm80, %v711, 0.0
    %v714 = vsel %vm80, %v712, 0.0
    %v715 = vadd.f32 %v713, %v714
    %v716 = vrot.slane %v715, 4
    %v717 = vadd.f32 %v715, %v716
    %v718 = vrot.slane %v717, 2
    %v719 = vadd.f32 %v717, %v718
    %v720 = vrot.slane %v719, 1
    %v721 = vadd.f32 %v719, %v720
    %v722 = vmul.f32 %v721, 0.0625
    %v723 = vmul.f32 %v710, %v710
    %v724 = vsub.f32 %v722, %v723
    %v725 = vsub.f32 %v699, %v710
    %v726 = vsub.f32 %v700, %v710
    %v727 = vadd.f32 %v724, 1e-05
    %v728 = vrsqrt.pop %v727
    %v729 = vmul.f32 %v728, %v727
    %v730 = vmul.f32 %v729, %v728
    %v731 = vmul.f32 0.5, %v730
    %v732 = vsub.f32 1.5, %v731
    %v733 = vmul.f32 %v728, %v732
    %vm734 = vweird.f32 %v727
    %vm735 = vweird.f32 %v728
    %vm736 = vmor %vm734, %vm735
    %v737 = vsel %vm736, %v728, %v733
    %v738 = vmul.f32 %v737, %v78
    %v739 = vperm.slane %v738, 4
    %v740 = vmul.f32 %v725, %v739
    %v741 = vmul.f32 %v726, %v739
    %v742 = vperm.slane %v78, 5
    %v743 = vadd.f32 %v740, %v742
    %v744 = vadd.f32 %v741, %v742
    %v745 = vperm.slane %v78, 2
    %v747 = vsel %vm80, %v743, 0
    %v750 = vsel %vm80, %v744, 0
    %752 = vmatpush.msra.mxu0 0.0
    %753 = vmatpush.msra.mxu0 0.0
    %754 = vmatpush.msra.mxu0 0.0
    %755 = vmatpush.msra.mxu0 0.0
    %756 = vmatpush.msra.mxu0 0.0
    %757 = vmatpush.msra.mxu0 0.0
    %758 = vmatpush.msra.mxu0 0.0
    %759 = vmatpush.msra.mxu0 0.0
    %760 = vmatpush.msra.mxu0 0.0
    %761 = vmatpush.msra.mxu0 0.0
    %762 = vmatpush.msra.mxu0 0.0
    %763 = vmatpush.msra.mxu0 0.0
    %764 = vmatpush.msra.mxu0 %v69
    %765 = vmatpush.msra.mxu0 %v68
    %766 = vmatpush.msra.mxu0 %v67
    %767 = vmatpush.msra.mxu0 %v66
    %768 = vmatmul.f32.gmra.mxu0 %v747
    %v769 = vpop.f32.mrf.mxu0
    %v770 = vadd.f32 %v745, %v769
    %771 = vmatmul.f32.gmra.mxu0 %v750
    %v772 = vpop.f32.mrf.mxu0
    %v773 = vadd.f32 %v745, %v772
    %774 = vdwg.mxu0
    %v775 = vmul.f32 %v770, %v770
    %v776 = vmul.f32 %v773, %v773
    %v777 = vmul.f32 %v770, %v775
    %v778 = vmul.f32 %v773, %v776
    %v779 = vmul.f32 %v777, 0.044715
    %v780 = vmul.f32 %v778, 0.044715
    %v781 = vadd.f32 %v770, %v779
    %v782 = vadd.f32 %v773, %v780
    %v783 = vmul.f32 %v781, 0.7978846
    %v784 = vmul.f32 %v782, 0.7978846
    %v785 = vtanh.pop %v783
    %v786 = vtanh.pop %v784
    %v787 = vadd.f32 %v785, 1.0
    %v788 = vadd.f32 %v786, 1.0
    %v789 = vmul.f32 %v787, 0.5
    %v790 = vmul.f32 %v788, 0.5
    %v791 = vmul.f32 %v770, %v789
    %v792 = vmul.f32 %v773, %v790
    %v793 = vperm.slane %v78, 3
    %vm794 = vcmask 523264
    %v796 = vsel %vm794, %v791, 0
    %v799 = vsel %vm794, %v792, 0
    %801 = vmatpush.msra.mxu0 0.0
    %802 = vmatpush.msra.mxu0 0.0
    %803 = vmatpush.msra.mxu0 0.0
    %804 = vmatpush.msra.mxu0 0.0
    %805 = vmatpush.msra.mxu0 0.0
    %806 = vmatpush.msra.mxu0 0.0
    %807 = vmatpush.msra.mxu0 0.0
    %808 = vmatpush.msra.mxu0 0.0
    %809 = vmatpush.msra.mxu0 %v77
    %810 = vmatpush.msra.mxu0 %v76
    %811 = vmatpush.msra.mxu0 %v75
    %812 = vmatpush.msra.mxu0 %v74
    %813 = vmatpush.msra.mxu0 %v73
    %814 = vmatpush.msra.mxu0 %v72
    %815 = vmatpush.msra.mxu0 %v71
    %816 = vmatpush.msra.mxu0 %v70
    %817 = vmatmul.f32.gmra.mxu0 %v796
    %v818 = vpop.f32.mrf.mxu0
    %v819 = vadd.f32 %v793, %v818
    %820 = vmatmul.f32.gmra.mxu0 %v799
    %v821 = vpop.f32.mrf.mxu0
    %v822 = vadd.f32 %v793, %v821
    %823 = vdwg.mxu0
    %v824 = vadd.f32 %v743, %v819
    %v825 = vadd.f32 %v744, %v822
    %v826 = vsel %vm80, %v824, 0.0
    %v827 = vsel %vm80, %v825, 0.0
    %v828 = vadd.f32 %v826, %v827
    %v829 = vrot.slane %v828, 4
    %v830 = vadd.f32 %v828, %v829
    %v831 = vrot.slane %v830, 2
    %v832 = vadd.f32 %v830, %v831
    %v833 = vrot.slane %v832, 1
    %v834 = vadd.f32 %v832, %v833
    %v835 = vmul.f32 %v834, 0.0625
    %v836 = vmul.f32 %v824, %v824
    %v837 = vmul.f32 %v825, %v825
    %v838 = vsel %vm80, %v836, 0.0
    %v839 = vsel %vm80, %v837, 0.0
    %v840 = vadd.f32 %v838, %v839
    %v841 = vrot.slane %v840, 4
    %v842 = vadd.f32 %v840, %v841
    %v843 = vrot.slane %v842, 2
    %v844 = vadd.f32 %v842, %v843
    %v845 = vrot.slane %v844, 1
    %v846 = vadd.f32 %v844, %v845
    %v847 = vmul.f32 %v846, 0.0625
    %v848 = vmul.f32 %v835, %v835
    %v849 = vsub.f32 %v847, %v848
    %v850 = vsub.f32 %v824, %v835
    %v851 = vsub.f32 %v825, %v835
    %v852 = vadd.f32 %v849, 1e-05
    %v853 = vrsqrt.pop %v852
    %v854 = vmul.f32 %v853, %v852
    %v855 = vmul.f32 %v854, %v853
    %v856 = vmul.f32 0.5, %v855
    %v857 = vsub.f32 1.5, %v856
    %v858 = vmul.f32 %v853, %v857
    %vm859 = vweird.f32 %v852
    %vm860 = vweird.f32 %v853
    %vm861 = vmor %vm859, %vm860
    %v862 = vsel %vm861, %v853, %v858
    %v863 = vmul.f32 %v862, %v78
    %v864 = vperm.slane %v863, 6
    %v865 = vmul.f32 %v850, %v864
    %v866 = vmul.f32 %v851, %v864
    %v867 = vperm.slane %v78, 7
    %v868 = vadd.f32 %v865, %v867
    %v869 = vadd.f32 %v866, %v867
    %s870 = scalar_lea.vmem %s1, 32
    %v871 = vld [vmem:[%s870] sm:$0xff]
    %v872 = vld [vmem:[%s870 + $0x8] sm:$0xff]
    %v873 = vld [vmem:[%s870 + $0x10] sm:$0xff]
    %v874 = vld [vmem:[%s870 + $0x18] sm:$0xff]
    %s875 = scalar_lea.vmem %s2, 32
    %v876 = vld [vmem:[%s875] sm:$0xff]
    %v877 = vld [vmem:[%s875 + $0x8] sm:$0xff]
    %v878 = vld [vmem:[%s875 + $0x10] sm:$0xff]
    %v879 = vld [vmem:[%s875 + $0x18] sm:$0xff]
    %s880 = scalar_lea.vmem %s3, 32
    %v881 = vld [vmem:[%s880] sm:$0xff]
    %v882 = vld [vmem:[%s880 + $0x8] sm:$0xff]
    %v883 = vld [vmem:[%s880 + $0x10] sm:$0xff]
    %v884 = vld [vmem:[%s880 + $0x18] sm:$0xff]
    %s885 = scalar_lea.vmem %s4, 64
    %v886 = vld [vmem:[%s885] sm:$0xff]
    %v887 = vld [vmem:[%s885 + $0x8] sm:$0xff]
    %v888 = vld [vmem:[%s885 + $0x10] sm:$0xff]
    %v889 = vld [vmem:[%s885 + $0x18] sm:$0xff]
    %v890 = vld [vmem:[%s885 + $0x20] sm:$0xff]
    %v891 = vld [vmem:[%s885 + $0x28] sm:$0xff]
    %v892 = vld [vmem:[%s885 + $0x30] sm:$0xff]
    %v893 = vld [vmem:[%s885 + $0x38] sm:$0xff]
    %s894 = scalar_lea.vmem [#allocation5], 8
    %v895 = vld [vmem:[%s894] sm:$0xff]
    %v896 = vperm.slane %v895, 0
    %v898 = vsel %vm80, %v868, 0
    %v901 = vsel %vm80, %v869, 0
    %903 = vmatpush.msra.mxu0 0.0
    %904 = vmatpush.msra.mxu0 0.0
    %905 = vmatpush.msra.mxu0 0.0
    %906 = vmatpush.msra.mxu0 0.0
    %907 = vmatpush.msra.mxu0 0.0
    %908 = vmatpush.msra.mxu0 0.0
    %909 = vmatpush.msra.mxu0 0.0
    %910 = vmatpush.msra.mxu0 0.0
    %911 = vmatpush.msra.mxu0 0.0
    %912 = vmatpush.msra.mxu0 0.0
    %913 = vmatpush.msra.mxu0 0.0
    %914 = vmatpush.msra.mxu0 0.0
    %915 = vmatpush.msra.mxu0 %v874
    %916 = vmatpush.msra.mxu0 %v873
    %917 = vmatpush.msra.mxu0 %v872
    %918 = vmatpush.msra.mxu0 %v871
    %919 = vmatmul.f32.gmra.mxu0 %v898
    %v920 = vpop.f32.mrf.mxu0
    %v921 = vadd.f32 %v896, %v920
    %922 = vmatmul.f32.gmra.mxu0 %v901
    %v923 = vpop.f32.mrf.mxu0
    %v924 = vadd.f32 %v896, %v923
    %925 = vdwg.mxu0
    %927 = vrot.lane.b32.xlu0 %v921, 96
    %v928 = vpop.permute.xlu0 %927
    %v929 = vsel %vm113, %v921, 0
    %v931 = vsel %vm113, %v928, 0
    %933 = vmatpush.xpose.msra.mxu0 0.0
    %934 = vmatpush.xpose.msra.mxu0 0.0
    %935 = vmatpush.xpose.msra.mxu0 0.0
    %936 = vmatpush.xpose.msra.mxu0 0.0
    %937 = vmatpush.xpose.msra.mxu0 0.0
    %938 = vmatpush.xpose.msra.mxu0 0.0
    %939 = vmatpush.xpose.msra.mxu0 0.0
    %940 = vmatpush.xpose.msra.mxu0 0.0
    %941 = vmatpush.xpose.msra.mxu0 0.0
    %942 = vmatpush.xpose.msra.mxu0 0.0
    %943 = vmatpush.xpose.msra.mxu0 0.0
    %944 = vmatpush.xpose.msra.mxu0 0.0
    %945 = vmatpush.xpose.msra.mxu0 0.0
    %946 = vmatpush.xpose.msra.mxu0 0.0
    %947 = vmatpush.xpose.msra.mxu0 0.0
    %948 = vmatpush.xpose.msra.mxu0 %v931
    %949 = vmatmul.f32.gmra.mxu0 %v929
    %v950 = vpop.f32.mrf.mxu0
    %v951 = vadd.f32 0.0, %v950
    %952 = vdwg.mxu0
    %954 = vrot.lane.b32.xlu0 %v924, 96
    %v955 = vpop.permute.xlu0 %954
    %v956 = vsel %vm113, %v924, 0
    %v958 = vsel %vm113, %v955, 0
    %960 = vmatpush.xpose.msra.mxu0 0.0
    %961 = vmatpush.xpose.msra.mxu0 0.0
    %962 = vmatpush.xpose.msra.mxu0 0.0
    %963 = vmatpush.xpose.msra.mxu0 0.0
    %964 = vmatpush.xpose.msra.mxu0 0.0
    %965 = vmatpush.xpose.msra.mxu0 0.0
    %966 = vmatpush.xpose.msra.mxu0 0.0
    %967 = vmatpush.xpose.msra.mxu0 0.0
    %968 = vmatpush.xpose.msra.mxu0 0.0
    %969 = vmatpush.xpose.msra.mxu0 0.0
    %970 = vmatpush.xpose.msra.mxu0 0.0
    %971 = vmatpush.xpose.msra.mxu0 0.0
    %972 = vmatpush.xpose.msra.mxu0 0.0
    %973 = vmatpush.xpose.msra.mxu0 0.0
    %974 = vmatpush.xpose.msra.mxu0 0.0
    %975 = vmatpush.xpose.msra.mxu0 %v958
    %976 = vmatmul.f32.gmra.mxu0 %v956
    %v977 = vpop.f32.mrf.mxu0
    %v978 = vadd.f32 0.0, %v977
    %979 = vdwg.mxu0
    %v980 = vmul.f32 %v951, 0.35355338
    %v981 = vmul.f32 %v978, 0.35355338
    %v982 = vsel %vm113, %v980, -inf
    %983 = vmax.xlane.f32.xlu0 %v982
    %v984 = vpop.xlane.xlu0 %983
    %v985 = vsel %vm113, %v981, -inf
    %986 = vmax.xlane.f32.xlu0 %v985
    %v987 = vpop.xlane.xlu0 %986
    %v988 = vsub.f32 %v980, %v984
    %v989 = vsub.f32 %v981, %v987
    %v990 = vmul.f32 %v988, 1.442695
    %v991 = vpow.pop %v990
    %v992 = vmul.f32 %v989, 1.442695
    %v993 = vpow.pop %v992
    %v994 = vsel %vm113, %v991, 0.0
    %995 = vadd.xlane.f32.xlu0 %v994
    %v996 = vpop.xlane.xlu0 %995
    %v997 = vsel %vm113, %v993, 0.0
    %998 = vadd.xlane.f32.xlu0 %v997
    %v999 = vpop.xlane.xlu0 %998
    %v1000 = vrcp.pop %v996
    %v1001 = vrcp.pop %v999
    %v1002 = vmul.f32 %v991, %v1000
    %v1003 = vmul.f32 %v993, %v1001
    %1004 = vrot.lane.b32.xlu0 %v921, 64
    %v1005 = vpop.permute.xlu0 %1004
    %v1008 = vsel %vm113, %v1002, 0
    %1010 = vmatpush.msra.mxu0 0.0
    %1011 = vmatpush.msra.mxu0 0.0
    %1012 = vmatpush.msra.mxu0 0.0
    %1013 = vmatpush.msra.mxu0 0.0
    %1014 = vmatpush.msra.mxu0 0.0
    %1015 = vmatpush.msra.mxu0 0.0
    %1016 = vmatpush.msra.mxu0 0.0
    %1017 = vmatpush.msra.mxu0 0.0
    %1018 = vmatpush.msra.mxu0 0.0
    %1019 = vmatpush.msra.mxu0 0.0
    %1020 = vmatpush.msra.mxu0 0.0
    %1021 = vmatpush.msra.mxu0 0.0
    %1022 = vmatpush.msra.mxu0 0.0
    %1023 = vmatpush.msra.mxu0 0.0
    %1024 = vmatpush.msra.mxu0 0.0
    %1025 = vmatpush.msra.mxu0 %v1005
    %1026 = vmatmul.f32.gmra.mxu0 %v1008
    %v1027 = vpop.f32.mrf.mxu0
    %v1028 = vadd.f32 0.0, %v1027
    %1029 = vdwg.mxu0
    %1030 = vrot.lane.b32.xlu0 %v924, 64
    %v1031 = vpop.permute.xlu0 %1030
    %v1034 = vsel %vm113, %v1003, 0
    %1036 = vmatpush.msra.mxu0 0.0
    %1037 = vmatpush.msra.mxu0 0.0
    %1038 = vmatpush.msra.mxu0 0.0
    %1039 = vmatpush.msra.mxu0 0.0
    %1040 = vmatpush.msra.mxu0 0.0
    %1041 = vmatpush.msra.mxu0 0.0
    %1042 = vmatpush.msra.mxu0 0.0
    %1043 = vmatpush.msra.mxu0 0.0
    %1044 = vmatpush.msra.mxu0 0.0
    %1045 = vmatpush.msra.mxu0 0.0
    %1046 = vmatpush.msra.mxu0 0.0
    %1047 = vmatpush.msra.mxu0 0.0
    %1048 = vmatpush.msra.mxu0 0.0
    %1049 = vmatpush.msra.mxu0 0.0
    %1050 = vmatpush.msra.mxu0 0.0
    %1051 = vmatpush.msra.mxu0 %v1031
    %1052 = vmatmul.f32.gmra.mxu0 %v1034
    %v1053 = vpop.f32.mrf.mxu0
    %v1054 = vadd.f32 0.0, %v1053
    %1055 = vdwg.mxu0
    %1056 = vrot.lane.b32.xlu0 %v921, 120
    %v1057 = vpop.permute.xlu0 %1056
    %1058 = vrot.lane.b32.xlu0 %v921, 88
    %v1059 = vpop.permute.xlu0 %1058
    %v1060 = vsel %vm113, %v1057, 0
    %v1062 = vsel %vm113, %v1059, 0
    %1064 = vmatpush.xpose.msra.mxu0 0.0
    %1065 = vmatpush.xpose.msra.mxu0 0.0
    %1066 = vmatpush.xpose.msra.mxu0 0.0
    %1067 = vmatpush.xpose.msra.mxu0 0.0
    %1068 = vmatpush.xpose.msra.mxu0 0.0
    %1069 = vmatpush.xpose.msra.mxu0 0.0
    %1070 = vmatpush.xpose.msra.mxu0 0.0
    %1071 = vmatpush.xpose.msra.mxu0 0.0
    %1072 = vmatpush.xpose.msra.mxu0 0.0
    %1073 = vmatpush.xpose.msra.mxu0 0.0
    %1074 = vmatpush.xpose.msra.mxu0 0.0
    %1075 = vmatpush.xpose.msra.mxu0 0.0
    %1076 = vmatpush.xpose.msra.mxu0 0.0
    %1077 = vmatpush.xpose.msra.mxu0 0.0
    %1078 = vmatpush.xpose.msra.mxu0 0.0
    %1079 = vmatpush.xpose.msra.mxu0 %v1062
    %1080 = vmatmul.f32.gmra.mxu0 %v1060
    %v1081 = vpop.f32.mrf.mxu0
    %v1082 = vadd.f32 0.0, %v1081
    %1083 = vdwg.mxu0
    %1084 = vrot.lane.b32.xlu0 %v924, 120
    %v1085 = vpop.permute.xlu0 %1084
    %1086 = vrot.lane.b32.xlu0 %v924, 88
    %v1087 = vpop.permute.xlu0 %1086
    %v1088 = vsel %vm113, %v1085, 0
    %v1090 = vsel %vm113, %v1087, 0
    %1092 = vmatpush.xpose.msra.mxu0 0.0
    %1093 = vmatpush.xpose.msra.mxu0 0.0
    %1094 = vmatpush.xpose.msra.mxu0 0.0
    %1095 = vmatpush.xpose.msra.mxu0 0.0
    %1096 = vmatpush.xpose.msra.mxu0 0.0
    %1097 = vmatpush.xpose.msra.mxu0 0.0
    %1098 = vmatpush.xpose.msra.mxu0 0.0
    %1099 = vmatpush.xpose.msra.mxu0 0.0
    %1100 = vmatpush.xpose.msra.mxu0 0.0
    %1101 = vmatpush.xpose.msra.mxu0 0.0
    %1102 = vmatpush.xpose.msra.mxu0 0.0
    %1103 = vmatpush.xpose.msra.mxu0 0.0
    %1104 = vmatpush.xpose.msra.mxu0 0.0
    %1105 = vmatpush.xpose.msra.mxu0 0.0
    %1106 = vmatpush.xpose.msra.mxu0 0.0
    %1107 = vmatpush.xpose.msra.mxu0 %v1090
    %1108 = vmatmul.f32.gmra.mxu0 %v1088
    %v1109 = vpop.f32.mrf.mxu0
    %v1110 = vadd.f32 0.0, %v1109
    %1111 = vdwg.mxu0
    %v1112 = vmul.f32 %v1082, 0.35355338
    %v1113 = vmul.f32 %v1110, 0.35355338
    %v1114 = vsel %vm113, %v1112, -inf
    %1115 = vmax.xlane.f32.xlu0 %v1114
    %v1116 = vpop.xlane.xlu0 %1115
    %v1117 = vsel %vm113, %v1113, -inf
    %1118 = vmax.xlane.f32.xlu0 %v1117
    %v1119 = vpop.xlane.xlu0 %1118
    %v1120 = vsub.f32 %v1112, %v1116
    %v1121 = vsub.f32 %v1113, %v1119
    %v1122 = vmul.f32 %v1120, 1.442695
    %v1123 = vpow.pop %v1122
    %v1124 = vmul.f32 %v1121, 1.442695
    %v1125 = vpow.pop %v1124
    %v1126 = vsel %vm113, %v1123, 0.0
    %1127 = vadd.xlane.f32.xlu0 %v1126
    %v1128 = vpop.xlane.xlu0 %1127
    %v1129 = vsel %vm113, %v1125, 0.0
    %1130 = vadd.xlane.f32.xlu0 %v1129
    %v1131 = vpop.xlane.xlu0 %1130
    %v1132 = vrcp.pop %v1128
    %v1133 = vrcp.pop %v1131
    %v1134 = vmul.f32 %v1123, %v1132
    %v1135 = vmul.f32 %v1125, %v1133
    %1136 = vrot.lane.b32.xlu0 %v921, 56
    %v1137 = vpop.permute.xlu0 %1136
    %v1140 = vsel %vm113, %v1134, 0
    %1142 = vmatpush.msra.mxu0 0.0
    %1143 = vmatpush.msra.mxu0 0.0
    %1144 = vmatpush.msra.mxu0 0.0
    %1145 = vmatpush.msra.mxu0 0.0
    %1146 = vmatpush.msra.mxu0 0.0
    %1147 = vmatpush.msra.mxu0 0.0
    %1148 = vmatpush.msra.mxu0 0.0
    %1149 = vmatpush.msra.mxu0 0.0
    %1150 = vmatpush.msra.mxu0 0.0
    %1151 = vmatpush.msra.mxu0 0.0
    %1152 = vmatpush.msra.mxu0 0.0
    %1153 = vmatpush.msra.mxu0 0.0
    %1154 = vmatpush.msra.mxu0 0.0
    %1155 = vmatpush.msra.mxu0 0.0
    %1156 = vmatpush.msra.mxu0 0.0
    %1157 = vmatpush.msra.mxu0 %v1137
    %1158 = vmatmul.f32.gmra.mxu0 %v1140
    %v1159 = vpop.f32.mrf.mxu0
    %v1160 = vadd.f32 0.0, %v1159
    %1161 = vdwg.mxu0
    %1162 = vrot.lane.b32.xlu0 %v924, 56
    %v1163 = vpop.permute.xlu0 %1162
    %v1166 = vsel %vm113, %v1135, 0
    %1168 = vmatpush.msra.mxu0 0.0
    %1169 = vmatpush.msra.mxu0 0.0
    %1170 = vmatpush.msra.mxu0 0.0
    %1171 = vmatpush.msra.mxu0 0.0
    %1172 = vmatpush.msra.mxu0 0.0
    %1173 = vmatpush.msra.mxu0 0.0
    %1174 = vmatpush.msra.mxu0 0.0
    %1175 = vmatpush.msra.mxu0 0.0
    %1176 = vmatpush.msra.mxu0 0.0
    %1177 = vmatpush.msra.mxu0 0.0
    %1178 = vmatpush.msra.mxu0 0.0
    %1179 = vmatpush.msra.mxu0 0.0
    %1180 = vmatpush.msra.mxu0 0.0
    %1181 = vmatpush.msra.mxu0 0.0
    %1182 = vmatpush.msra.mxu0 0.0
    %1183 = vmatpush.msra.mxu0 %v1163
    %1184 = vmatmul.f32.gmra.mxu0 %v1166
    %v1185 = vpop.f32.mrf.mxu0
    %v1186 = vadd.f32 0.0, %v1185
    %1187 = vdwg.mxu0
    %1188 = vrot.lane.b32.xlu0 %v921, 112
    %v1189 = vpop.permute.xlu0 %1188
    %1190 = vrot.lane.b32.xlu0 %v921, 80
    %v1191 = vpop.permute.xlu0 %1190
    %v1192 = vsel %vm113, %v1189, 0
    %v1194 = vsel %vm113, %v1191, 0
    %1196 = vmatpush.xpose.msra.mxu0 0.0
    %1197 = vmatpush.xpose.msra.mxu0 0.0
    %1198 = vmatpush.xpose.msra.mxu0 0.0
    %1199 = vmatpush.xpose.msra.mxu0 0.0
    %1200 = vmatpush.xpose.msra.mxu0 0.0
    %1201 = vmatpush.xpose.msra.mxu0 0.0
    %1202 = vmatpush.xpose.msra.mxu0 0.0
    %1203 = vmatpush.xpose.msra.mxu0 0.0
    %1204 = vmatpush.xpose.msra.mxu0 0.0
    %1205 = vmatpush.xpose.msra.mxu0 0.0
    %1206 = vmatpush.xpose.msra.mxu0 0.0
    %1207 = vmatpush.xpose.msra.mxu0 0.0
    %1208 = vmatpush.xpose.msra.mxu0 0.0
    %1209 = vmatpush.xpose.msra.mxu0 0.0
    %1210 = vmatpush.xpose.msra.mxu0 0.0
    %1211 = vmatpush.xpose.msra.mxu0 %v1194
    %1212 = vmatmul.f32.gmra.mxu0 %v1192
    %v1213 = vpop.f32.mrf.mxu0
    %v1214 = vadd.f32 0.0, %v1213
    %1215 = vdwg.mxu0
    %1216 = vrot.lane.b32.xlu0 %v924, 112
    %v1217 = vpop.permute.xlu0 %1216
    %1218 = vrot.lane.b32.xlu0 %v924, 80
    %v1219 = vpop.permute.xlu0 %1218
    %v1220 = vsel %vm113, %v1217, 0
    %v1222 = vsel %vm113, %v1219, 0
    %1224 = vmatpush.xpose.msra.mxu0 0.0
    %1225 = vmatpush.xpose.msra.mxu0 0.0
    %1226 = vmatpush.xpose.msra.mxu0 0.0
    %1227 = vmatpush.xpose.msra.mxu0 0.0
    %1228 = vmatpush.xpose.msra.mxu0 0.0
    %1229 = vmatpush.xpose.msra.mxu0 0.0
    %1230 = vmatpush.xpose.msra.mxu0 0.0
    %1231 = vmatpush.xpose.msra.mxu0 0.0
    %1232 = vmatpush.xpose.msra.mxu0 0.0
    %1233 = vmatpush.xpose.msra.mxu0 0.0
    %1234 = vmatpush.xpose.msra.mxu0 0.0
    %1235 = vmatpush.xpose.msra.mxu0 0.0
    %1236 = vmatpush.xpose.msra.mxu0 0.0
    %1237 = vmatpush.xpose.msra.mxu0 0.0
    %1238 = vmatpush.xpose.msra.mxu0 0.0
    %1239 = vmatpush.xpose.msra.mxu0 %v1222
    %1240 = vmatmul.f32.gmra.mxu0 %v1220
    %v1241 = vpop.f32.mrf.mxu0
    %v1242 = vadd.f32 0.0, %v1241
    %1243 = vdwg.mxu0
    %v1244 = vmul.f32 %v1214, 0.35355338
    %v1245 = vmul.f32 %v1242, 0.35355338
    %v1246 = vsel %vm113, %v1244, -inf
    %1247 = vmax.xlane.f32.xlu0 %v1246
    %v1248 = vpop.xlane.xlu0 %1247
    %v1249 = vsel %vm113, %v1245, -inf
    %1250 = vmax.xlane.f32.xlu0 %v1249
    %v1251 = vpop.xlane.xlu0 %1250
    %v1252 = vsub.f32 %v1244, %v1248
    %v1253 = vsub.f32 %v1245, %v1251
    %v1254 = vmul.f32 %v1252, 1.442695
    %v1255 = vpow.pop %v1254
    %v1256 = vmul.f32 %v1253, 1.442695
    %v1257 = vpow.pop %v1256
    %v1258 = vsel %vm113, %v1255, 0.0
    %1259 = vadd.xlane.f32.xlu0 %v1258
    %v1260 = vpop.xlane.xlu0 %1259
    %v1261 = vsel %vm113, %v1257, 0.0
    %1262 = vadd.xlane.f32.xlu0 %v1261
    %v1263 = vpop.xlane.xlu0 %1262
    %v1264 = vrcp.pop %v1260
    %v1265 = vrcp.pop %v1263
    %v1266 = vmul.f32 %v1255, %v1264
    %v1267 = vmul.f32 %v1257, %v1265
    %1268 = vrot.lane.b32.xlu0 %v921, 48
    %v1269 = vpop.permute.xlu0 %1268
    %v1272 = vsel %vm113, %v1266, 0
    %1274 = vmatpush.msra.mxu0 0.0
    %1275 = vmatpush.msra.mxu0 0.0
    %1276 = vmatpush.msra.mxu0 0.0
    %1277 = vmatpush.msra.mxu0 0.0
    %1278 = vmatpush.msra.mxu0 0.0
    %1279 = vmatpush.msra.mxu0 0.0
    %1280 = vmatpush.msra.mxu0 0.0
    %1281 = vmatpush.msra.mxu0 0.0
    %1282 = vmatpush.msra.mxu0 0.0
    %1283 = vmatpush.msra.mxu0 0.0
    %1284 = vmatpush.msra.mxu0 0.0
    %1285 = vmatpush.msra.mxu0 0.0
    %1286 = vmatpush.msra.mxu0 0.0
    %1287 = vmatpush.msra.mxu0 0.0
    %1288 = vmatpush.msra.mxu0 0.0
    %1289 = vmatpush.msra.mxu0 %v1269
    %1290 = vmatmul.f32.gmra.mxu0 %v1272
    %v1291 = vpop.f32.mrf.mxu0
    %v1292 = vadd.f32 0.0, %v1291
    %1293 = vdwg.mxu0
    %1294 = vrot.lane.b32.xlu0 %v924, 48
    %v1295 = vpop.permute.xlu0 %1294
    %v1298 = vsel %vm113, %v1267, 0
    %1300 = vmatpush.msra.mxu0 0.0
    %1301 = vmatpush.msra.mxu0 0.0
    %1302 = vmatpush.msra.mxu0 0.0
    %1303 = vmatpush.msra.mxu0 0.0
    %1304 = vmatpush.msra.mxu0 0.0
    %1305 = vmatpush.msra.mxu0 0.0
    %1306 = vmatpush.msra.mxu0 0.0
    %1307 = vmatpush.msra.mxu0 0.0
    %1308 = vmatpush.msra.mxu0 0.0
    %1309 = vmatpush.msra.mxu0 0.0
    %1310 = vmatpush.msra.mxu0 0.0
    %1311 = vmatpush.msra.mxu0 0.0
    %1312 = vmatpush.msra.mxu0 0.0
    %1313 = vmatpush.msra.mxu0 0.0
    %1314 = vmatpush.msra.mxu0 0.0
    %1315 = vmatpush.msra.mxu0 %v1295
    %1316 = vmatmul.f32.gmra.mxu0 %v1298
    %v1317 = vpop.f32.mrf.mxu0
    %v1318 = vadd.f32 0.0, %v1317
    %1319 = vdwg.mxu0
    %1320 = vrot.lane.b32.xlu0 %v921, 104
    %v1321 = vpop.permute.xlu0 %1320
    %1322 = vrot.lane.b32.xlu0 %v921, 72
    %v1323 = vpop.permute.xlu0 %1322
    %v1324 = vsel %vm113, %v1321, 0
    %v1326 = vsel %vm113, %v1323, 0
    %1328 = vmatpush.xpose.msra.mxu0 0.0
    %1329 = vmatpush.xpose.msra.mxu0 0.0
    %1330 = vmatpush.xpose.msra.mxu0 0.0
    %1331 = vmatpush.xpose.msra.mxu0 0.0
    %1332 = vmatpush.xpose.msra.mxu0 0.0
    %1333 = vmatpush.xpose.msra.mxu0 0.0
    %1334 = vmatpush.xpose.msra.mxu0 0.0
    %1335 = vmatpush.xpose.msra.mxu0 0.0
    %1336 = vmatpush.xpose.msra.mxu0 0.0
    %1337 = vmatpush.xpose.msra.mxu0 0.0
    %1338 = vmatpush.xpose.msra.mxu0 0.0
    %1339 = vmatpush.xpose.msra.mxu0 0.0
    %1340 = vmatpush.xpose.msra.mxu0 0.0
    %1341 = vmatpush.xpose.msra.mxu0 0.0
    %1342 = vmatpush.xpose.msra.mxu0 0.0
    %1343 = vmatpush.xpose.msra.mxu0 %v1326
    %1344 = vmatmul.f32.gmra.mxu0 %v1324
    %v1345 = vpop.f32.mrf.mxu0
    %v1346 = vadd.f32 0.0, %v1345
    %1347 = vdwg.mxu0
    %1348 = vrot.lane.b32.xlu0 %v924, 104
    %v1349 = vpop.permute.xlu0 %1348
    %1350 = vrot.lane.b32.xlu0 %v924, 72
    %v1351 = vpop.permute.xlu0 %1350
    %v1352 = vsel %vm113, %v1349, 0
    %v1354 = vsel %vm113, %v1351, 0
    %1356 = vmatpush.xpose.msra.mxu0 0.0
    %1357 = vmatpush.xpose.msra.mxu0 0.0
    %1358 = vmatpush.xpose.msra.mxu0 0.0
    %1359 = vmatpush.xpose.msra.mxu0 0.0
    %1360 = vmatpush.xpose.msra.mxu0 0.0
    %1361 = vmatpush.xpose.msra.mxu0 0.0
    %1362 = vmatpush.xpose.msra.mxu0 0.0
    %1363 = vmatpush.xpose.msra.mxu0 0.0
    %1364 = vmatpush.xpose.msra.mxu0 0.0
    %1365 = vmatpush.xpose.msra.mxu0 0.0
    %1366 = vmatpush.xpose.msra.mxu0 0.0
    %1367 = vmatpush.xpose.msra.mxu0 0.0
    %1368 = vmatpush.xpose.msra.mxu0 0.0
    %1369 = vmatpush.xpose.msra.mxu0 0.0
    %1370 = vmatpush.xpose.msra.mxu0 0.0
    %1371 = vmatpush.xpose.msra.mxu0 %v1354
    %1372 = vmatmul.f32.gmra.mxu0 %v1352
    %v1373 = vpop.f32.mrf.mxu0
    %v1374 = vadd.f32 0.0, %v1373
    %1375 = vdwg.mxu0
    %v1376 = vmul.f32 %v1346, 0.35355338
    %v1377 = vmul.f32 %v1374, 0.35355338
    %v1378 = vsel %vm113, %v1376, -inf
    %1379 = vmax.xlane.f32.xlu0 %v1378
    %v1380 = vpop.xlane.xlu0 %1379
    %v1381 = vsel %vm113, %v1377, -inf
    %1382 = vmax.xlane.f32.xlu0 %v1381
    %v1383 = vpop.xlane.xlu0 %1382
    %v1384 = vsub.f32 %v1376, %v1380
    %v1385 = vsub.f32 %v1377, %v1383
    %v1386 = vmul.f32 %v1384, 1.442695
    %v1387 = vpow.pop %v1386
    %v1388 = vmul.f32 %v1385, 1.442695
    %v1389 = vpow.pop %v1388
    %v1390 = vsel %vm113, %v1387, 0.0
    %1391 = vadd.xlane.f32.xlu0 %v1390
    %v1392 = vpop.xlane.xlu0 %1391
    %v1393 = vsel %vm113, %v1389, 0.0
    %1394 = vadd.xlane.f32.xlu0 %v1393
    %v1395 = vpop.xlane.xlu0 %1394
    %v1396 = vrcp.pop %v1392
    %v1397 = vrcp.pop %v1395
    %v1398 = vmul.f32 %v1387, %v1396
    %v1399 = vmul.f32 %v1389, %v1397
    %1400 = vrot.lane.b32.xlu0 %v921, 40
    %v1401 = vpop.permute.xlu0 %1400
    %v1404 = vsel %vm113, %v1398, 0
    %1406 = vmatpush.msra.mxu0 0.0
    %1407 = vmatpush.msra.mxu0 0.0
    %1408 = vmatpush.msra.mxu0 0.0
    %1409 = vmatpush.msra.mxu0 0.0
    %1410 = vmatpush.msra.mxu0 0.0
    %1411 = vmatpush.msra.mxu0 0.0
    %1412 = vmatpush.msra.mxu0 0.0
    %1413 = vmatpush.msra.mxu0 0.0
    %1414 = vmatpush.msra.mxu0 0.0
    %1415 = vmatpush.msra.mxu0 0.0
    %1416 = vmatpush.msra.mxu0 0.0
    %1417 = vmatpush.msra.mxu0 0.0
    %1418 = vmatpush.msra.mxu0 0.0
    %1419 = vmatpush.msra.mxu0 0.0
    %1420 = vmatpush.msra.mxu0 0.0
    %1421 = vmatpush.msra.mxu0 %v1401
    %1422 = vmatmul.f32.gmra.mxu0 %v1404
    %v1423 = vpop.f32.mrf.mxu0
    %v1424 = vadd.f32 0.0, %v1423
    %1425 = vdwg.mxu0
    %1426 = vrot.lane.b32.xlu0 %v924, 40
    %v1427 = vpop.permute.xlu0 %1426
    %v1430 = vsel %vm113, %v1399, 0
    %1432 = vmatpush.msra.mxu0 0.0
    %1433 = vmatpush.msra.mxu0 0.0
    %1434 = vmatpush.msra.mxu0 0.0
    %1435 = vmatpush.msra.mxu0 0.0
    %1436 = vmatpush.msra.mxu0 0.0
    %1437 = vmatpush.msra.mxu0 0.0
    %1438 = vmatpush.msra.mxu0 0.0
    %1439 = vmatpush.msra.mxu0 0.0
    %1440 = vmatpush.msra.mxu0 0.0
    %1441 = vmatpush.msra.mxu0 0.0
    %1442 = vmatpush.msra.mxu0 0.0
    %1443 = vmatpush.msra.mxu0 0.0
    %1444 = vmatpush.msra.mxu0 0.0
    %1445 = vmatpush.msra.mxu0 0.0
    %1446 = vmatpush.msra.mxu0 0.0
    %1447 = vmatpush.msra.mxu0 %v1427
    %1448 = vmatmul.f32.gmra.mxu0 %v1430
    %v1449 = vpop.f32.mrf.mxu0
    %v1450 = vadd.f32 0.0, %v1449
    %1451 = vdwg.mxu0
    %1454 = vrot.lane.b32.xlu0 %v1160, 8
    %v1455 = vpop.permute.xlu0 %1454
    %1456 = vrot.lane.b32.xlu0 %v1186, 8
    %v1457 = vpop.permute.xlu0 %1456
    %1462 = vrot.lane.b32.xlu0 %v1292, 16
    %v1463 = vpop.permute.xlu0 %1462
    %1464 = vrot.lane.b32.xlu0 %v1318, 16
    %v1465 = vpop.permute.xlu0 %1464
    %1470 = vrot.lane.b32.xlu0 %v1424, 24
    %v1471 = vpop.permute.xlu0 %1470
    %1472 = vrot.lane.b32.xlu0 %v1450, 24
    %v1473 = vpop.permute.xlu0 %1472
    %v1476 = vsel %vm113, %v1028, %v1455
    %v1477 = vsel %vm113, %v1054, %v1457
    %v1478 = vsel %vm663, %v1476, %v1463
    %v1479 = vsel %vm663, %v1477, %v1465
    %v1480 = vsel %vm666, %v1478, %v1471
    %v1481 = vsel %vm666, %v1479, %v1473
    %v1482 = vperm.slane %v895, 1
    %v1484 = vsel %vm80, %v1480, 0
    %v1487 = vsel %vm80, %v1481, 0
    %1489 = vmatpush.msra.mxu0 0.0
    %1490 = vmatpush.msra.mxu0 0.0
    %1491 = vmatpush.msra.mxu0 0.0
    %1492 = vmatpush.msra.mxu0 0.0
    %1493 = vmatpush.msra.mxu0 0.0
    %1494 = vmatpush.msra.mxu0 0.0
    %1495 = vmatpush.msra.mxu0 0.0
    %1496 = vmatpush.msra.mxu0 0.0
    %1497 = vmatpush.msra.mxu0 0.0
    %1498 = vmatpush.msra.mxu0 0.0
    %1499 = vmatpush.msra.mxu0 0.0
    %1500 = vmatpush.msra.mxu0 0.0
    %1501 = vmatpush.msra.mxu0 %v879
    %1502 = vmatpush.msra.mxu0 %v878
    %1503 = vmatpush.msra.mxu0 %v877
    %1504 = vmatpush.msra.mxu0 %v876
    %1505 = vmatmul.f32.gmra.mxu0 %v1484
    %v1506 = vpop.f32.mrf.mxu0
    %v1507 = vadd.f32 %v1482, %v1506
    %1508 = vmatmul.f32.gmra.mxu0 %v1487
    %v1509 = vpop.f32.mrf.mxu0
    %v1510 = vadd.f32 %v1482, %v1509
    %1511 = vdwg.mxu0
    %v1512 = vadd.f32 %v868, %v1507
    %v1513 = vadd.f32 %v869, %v1510
    %v1514 = vsel %vm80, %v1512, 0.0
    %v1515 = vsel %vm80, %v1513, 0.0
    %v1516 = vadd.f32 %v1514, %v1515
    %v1517 = vrot.slane %v1516, 4
    %v1518 = vadd.f32 %v1516, %v1517
    %v1519 = vrot.slane %v1518, 2
    %v1520 = vadd.f32 %v1518, %v1519
    %v1521 = vrot.slane %v1520, 1
    %v1522 = vadd.f32 %v1520, %v1521
    %v1523 = vmul.f32 %v1522, 0.0625
    %v1524 = vmul.f32 %v1512, %v1512
    %v1525 = vmul.f32 %v1513, %v1513
    %v1526 = vsel %vm80, %v1524, 0.0
    %v1527 = vsel %vm80, %v1525, 0.0
    %v1528 = vadd.f32 %v1526, %v1527
    %v1529 = vrot.slane %v1528, 4
    %v1530 = vadd.f32 %v1528, %v1529
    %v1531 = vrot.slane %v1530, 2
    %v1532 = vadd.f32 %v1530, %v1531
    %v1533 = vrot.slane %v1532, 1
    %v1534 = vadd.f32 %v1532, %v1533
    %v1535 = vmul.f32 %v1534, 0.0625
    %v1536 = vmul.f32 %v1523, %v1523
    %v1537 = vsub.f32 %v1535, %v1536
    %v1538 = vsub.f32 %v1512, %v1523
    %v1539 = vsub.f32 %v1513, %v1523
    %v1540 = vadd.f32 %v1537, 1e-05
    %v1541 = vrsqrt.pop %v1540
    %v1542 = vmul.f32 %v1541, %v1540
    %v1543 = vmul.f32 %v1542, %v1541
    %v1544 = vmul.f32 0.5, %v1543
    %v1545 = vsub.f32 1.5, %v1544
    %v1546 = vmul.f32 %v1541, %v1545
    %vm1547 = vweird.f32 %v1540
    %vm1548 = vweird.f32 %v1541
    %vm1549 = vmor %vm1547, %vm1548
    %v1550 = vsel %vm1549, %v1541, %v1546
    %v1551 = vmul.f32 %v1550, %v895
    %v1552 = vperm.slane %v1551, 4
    %v1553 = vmul.f32 %v1538, %v1552
    %v1554 = vmul.f32 %v1539, %v1552
    %v1555 = vperm.slane %v895, 5
    %v1556 = vadd.f32 %v1553, %v1555
    %v1557 = vadd.f32 %v1554, %v1555
    %v1558 = vperm.slane %v895, 2
    %v1560 = vsel %vm80, %v1556, 0
    %v1563 = vsel %vm80, %v1557, 0
    %1565 = vmatpush.msra.mxu0 0.0
    %1566 = vmatpush.msra.mxu0 0.0
    %1567 = vmatpush.msra.mxu0 0.0
    %1568 = vmatpush.msra.mxu0 0.0
    %1569 = vmatpush.msra.mxu0 0.0
    %1570 = vmatpush.msra.mxu0 0.0
    %1571 = vmatpush.msra.mxu0 0.0
    %1572 = vmatpush.msra.mxu0 0.0
    %1573 = vmatpush.msra.mxu0 0.0
    %1574 = vmatpush.msra.mxu0 0.0
    %1575 = vmatpush.msra.mxu0 0.0
    %1576 = vmatpush.msra.mxu0 0.0
    %1577 = vmatpush.msra.mxu0 %v884
    %1578 = vmatpush.msra.mxu0 %v883
    %1579 = vmatpush.msra.mxu0 %v882
    %1580 = vmatpush.msra.mxu0 %v881
    %1581 = vmatmul.f32.gmra.mxu0 %v1560
    %v1582 = vpop.f32.mrf.mxu0
    %v1583 = vadd.f32 %v1558, %v1582
    %1584 = vmatmul.f32.gmra.mxu0 %v1563
    %v1585 = vpop.f32.mrf.mxu0
    %v1586 = vadd.f32 %v1558, %v1585
    %1587 = vdwg.mxu0
    %v1588 = vmul.f32 %v1583, %v1583
    %v1589 = vmul.f32 %v1586, %v1586
    %v1590 = vmul.f32 %v1583, %v1588
    %v1591 = vmul.f32 %v1586, %v1589
    %v1592 = vmul.f32 %v1590, 0.044715
    %v1593 = vmul.f32 %v1591, 0.044715
    %v1594 = vadd.f32 %v1583, %v1592
    %v1595 = vadd.f32 %v1586, %v1593
    %v1596 = vmul.f32 %v1594, 0.7978846
    %v1597 = vmul.f32 %v1595, 0.7978846
    %v1598 = vtanh.pop %v1596
    %v1599 = vtanh.pop %v1597
    %v1600 = vadd.f32 %v1598, 1.0
    %v1601 = vadd.f32 %v1599, 1.0
    %v1602 = vmul.f32 %v1600, 0.5
    %v1603 = vmul.f32 %v1601, 0.5
    %v1604 = vmul.f32 %v1583, %v1602
    %v1605 = vmul.f32 %v1586, %v1603
    %v1606 = vperm.slane %v895, 3
    %v1608 = vsel %vm794, %v1604, 0
    %v1611 = vsel %vm794, %v1605, 0
    %1613 = vmatpush.msra.mxu0 0.0
    %1614 = vmatpush.msra.mxu0 0.0
    %1615 = vmatpush.msra.mxu0 0.0
    %1616 = vmatpush.msra.mxu0 0.0
    %1617 = vmatpush.msra.mxu0 0.0
    %1618 = vmatpush.msra.mxu0 0.0
    %1619 = vmatpush.msra.mxu0 0.0
    %1620 = vmatpush.msra.mxu0 0.0
    %1621 = vmatpush.msra.mxu0 %v893
    %1622 = vmatpush.msra.mxu0 %v892
    %1623 = vmatpush.msra.mxu0 %v891
    %1624 = vmatpush.msra.mxu0 %v890
    %1625 = vmatpush.msra.mxu0 %v889
    %1626 = vmatpush.msra.mxu0 %v888
    %1627 = vmatpush.msra.mxu0 %v887
    %1628 = vmatpush.msra.mxu0 %v886
    %1629 = vmatmul.f32.gmra.mxu0 %v1608
    %v1630 = vpop.f32.mrf.mxu0
    %v1631 = vadd.f32 %v1606, %v1630
    %1632 = vmatmul.f32.gmra.mxu0 %v1611
    %v1633 = vpop.f32.mrf.mxu0
    %v1634 = vadd.f32 %v1606, %v1633
    %1635 = vdwg.mxu0
    %v1636 = vadd.f32 %v1556, %v1631
    %v1637 = vadd.f32 %v1557, %v1634
    %v1638 = vsel %vm80, %v1636, 0.0
    %v1639 = vsel %vm80, %v1637, 0.0
    %v1640 = vadd.f32 %v1638, %v1639
    %v1641 = vrot.slane %v1640, 4
    %v1642 = vadd.f32 %v1640, %v1641
    %v1643 = vrot.slane %v1642, 2
    %v1644 = vadd.f32 %v1642, %v1643
    %v1645 = vrot.slane %v1644, 1
    %v1646 = vadd.f32 %v1644, %v1645
    %v1647 = vmul.f32 %v1646, 0.0625
    %v1648 = vmul.f32 %v1636, %v1636
    %v1649 = vmul.f32 %v1637, %v1637
    %v1650 = vsel %vm80, %v1648, 0.0
    %v1651 = vsel %vm80, %v1649, 0.0
    %v1652 = vadd.f32 %v1650, %v1651
    %v1653 = vrot.slane %v1652, 4
    %v1654 = vadd.f32 %v1652, %v1653
    %v1655 = vrot.slane %v1654, 2
    %v1656 = vadd.f32 %v1654, %v1655
    %v1657 = vrot.slane %v1656, 1
    %v1658 = vadd.f32 %v1656, %v1657
    %v1659 = vmul.f32 %v1658, 0.0625
    %v1660 = vmul.f32 %v1647, %v1647
    %v1661 = vsub.f32 %v1659, %v1660
    %v1662 = vsub.f32 %v1636, %v1647
    %v1663 = vsub.f32 %v1637, %v1647
    %v1664 = vadd.f32 %v1661, 1e-05
    %v1665 = vrsqrt.pop %v1664
    %v1666 = vmul.f32 %v1665, %v1664
    %v1667 = vmul.f32 %v1666, %v1665
    %v1668 = vmul.f32 0.5, %v1667
    %v1669 = vsub.f32 1.5, %v1668
    %v1670 = vmul.f32 %v1665, %v1669
    %vm1671 = vweird.f32 %v1664
    %vm1672 = vweird.f32 %v1665
    %vm1673 = vmor %vm1671, %vm1672
    %v1674 = vsel %vm1673, %v1665, %v1670
    %v1675 = vmul.f32 %v1674, %v895
    %v1676 = vperm.slane %v1675, 6
    %v1677 = vmul.f32 %v1662, %v1676
    %v1678 = vmul.f32 %v1663, %v1676
    %v1679 = vperm.slane %v895, 7
    %v1680 = vadd.f32 %v1677, %v1679
    %v1681 = vadd.f32 %v1678, %v1679
    %1682 = vst.msk [vmem:[#allocation7] sm:$0xff] %vm80, %v1680
    %1683 = vst.msk [vmem:[#allocation7 + $0x8] sm:$0xff] %vm80, %v1681
    // Predicated region
    $region34: #{tst_encoder.1} parent=1 // pred_check
      _
    $region35: #{tst_encoder.1} parent=1 // pred_check_branch
      %1685 = sbr.rel (0) target = $region37
    $region36: #{tst_encoder.1} parent=1 // pred_region
      %1687 = vsyncadd [#allocation4], 0
      %s1688 = sshll.u32 [#allocation7], 4
      %s1689 = int_to_ptr.vmem [resolvable:$true] %s1688
      %s1690 = sshll.u32 %s6, 4
      %s1691 = int_to_ptr.hbm [resolvable:$true] %s1690
      %1696 = dma.vmem_to_hbm [thread:$0]  %s1689, 256, %s1691, [#allocation4], 128, 128, 8
    $region37: #{tst_encoder.1} parent=1 // pred_fallthru
      _
    // Predicated region
    $region38: #{tst_encoder.1} parent=1 // pred_check
      _
    $region39: #{tst_encoder.1} parent=1 // pred_check_branch
      %1698 = sbr.rel (0) target = $region41
    $region40: #{tst_encoder.1} parent=1 // pred_region
      %1700 = dma.done [#allocation4], 256
    $region41: #{tst_encoder.1} parent=1 // pred_fallthru
      _
    %1701 = vsyncpa [#allocation3], 1
    %1702 = vsyncpa [#allocation6], 1
    %1703 = vsyncpa [#allocation4], 1

</llo_original>
